<compile_context>
chip_gen: v5e
topology: v5e:2x2
jax: 0.10.0
libtpu: 0.0.40
codegen_flags: <defaults>
</compile_context>

<pallas_src>
import jax
import jax.numpy as jnp
from jax.experimental import pallas as pl
from jax.experimental.pallas import tpu as pltpu


def _round_up(n, m=128):
    return ((n + m - 1) // m) * m


def _vmem_capacity_bytes():
    """Physical VMEM of the local TPU generation (v5e/v6e: 128 MiB, v7x: 64 MiB)."""
    try:
        cap = int(pltpu.get_tpu_info().vmem_capacity_bytes)
        if cap > 0:
            return cap
    except Exception:
        pass
    return 64 << 20  # conservative default (v7x-sized)


def _clamp_vmem(requested, cap):
    return int(max(16 << 20, min(int(requested), cap - (2 << 20))))


def _vocab_tile_bytes(tile, Kfused, Bp):
    # double-buffered streaming buffers for one vocab tile
    return (2 * Kfused * tile * 2      # w_out tile  (bf16)
            + 2 * Bp * tile * 4        # logits tile (f32)
            + 2 * tile * 4             # bias tile   (f32)
            + 2 * Bp * Kfused * 2)     # fused LHS   (bf16)


def _select_vocab_tile(Vp, Kfused, Bp, vmem_cap):
    """Largest vocab tile whose streaming buffers fit ~1/4 of physical VMEM."""
    budget = vmem_cap // 4
    tile = 128
    for t in (256, 512, 1024, 2048):
        if Vp % t != 0:
            continue
        if _vocab_tile_bytes(t, Kfused, Bp) <= budget:
            tile = t
    return tile


def _pad_batch(x, Bp):
    B = x.shape[0]
    if B == Bp:
        return x
    return jnp.pad(x, [(0, Bp - B)] + [(0, 0)] * (x.ndim - 1))


# ----------------------------------------------------------------------------
# Kernel 1: attention + weighted encoder rep + fused single-step GRU.
# ----------------------------------------------------------------------------
def _make_attn_gru_kernel(*, E, F2, Hd, Ep, Wp, Hdg):
    off_e, off_w, off_h = 0, Ep, Ep + Wp

    def kernel(emb_ref, hidden_ref, enc_ref, eproj_ref,
               w_attn_h_ref, w_gru_ref, b_gru_ref,
               lhs_ref, new_hidden_ref):
        f32 = jnp.float32
        emb = emb_ref[...]                              # (Bp, E)      bf16
        hidden = hidden_ref[...]                        # (Bp, Hd)     f32
        hidden_bf = hidden.astype(jnp.bfloat16)

        # ---- attention (tutorial form: score = sum_A tanh(W_h h + W_e e + b)) ----
        # e_proj is laid out (Bp, A, S): S on lanes, A on sublanes -> lane-dense
        # tanh/add, and the A-reduction is a cheap sublane reduce.
        h_proj = jnp.dot(hidden_bf, w_attn_h_ref[...],
                         preferred_element_type=f32)                       # (Bp, A)
        energy = jnp.tanh(h_proj[:, :, None] + eproj_ref[...])             # (Bp, A, S)
        scores = jnp.sum(energy, axis=1)                                   # (Bp, S)
        scores = scores - jnp.max(scores, axis=1, keepdims=True)
        p = jnp.exp(scores)
        attn = p * pl.reciprocal(jnp.sum(p, axis=1, keepdims=True), approx=True)

        # ---- weighted encoder rep: VPU multiply + sublane reduce (MXU stays free) ----
        enc = enc_ref[...].astype(f32)                                     # (Bp, S, F2)
        weighted = jnp.sum(attn[:, :, None] * enc, axis=1)                 # (Bp, F2) f32
        weighted_bf = weighted.astype(jnp.bfloat16)

        # ---- fused LHS [emb | weighted | hidden] at 128-aligned segment offsets ----
        lhs_ref[...] = jnp.zeros_like(lhs_ref)      # zero the pad lanes
        lhs_ref[:, off_e:off_e + E] = emb
        lhs_ref[:, off_w:off_w + F2] = weighted_bf
        lhs_ref[:, off_h:off_h + Hd] = hidden_bf

        # ---- single fused GRU matmul: gate column blocks [r | z | gi_n | gh_n] ----
        gates = (jnp.dot(lhs_ref[...], w_gru_ref[...], preferred_element_type=f32)
                 + b_gru_ref[...])                                         # (Bp, 4*Hdg)
        r = jax.nn.sigmoid(gates[:, 0:Hd])
        z = jax.nn.sigmoid(gates[:, Hdg:Hdg + Hd])
        gi_n = gates[:, 2 * Hdg:2 * Hdg + Hd]
        gh_n = gates[:, 3 * Hdg:3 * Hdg + Hd]
        n = jnp.tanh(gi_n + r * gh_n)
        h_new = (1.0 - z) * n + z * hidden                                 # (Bp, Hd) f32
        new_hidden_ref[...] = h_new

        # Overwrite the hidden segment with h_new: lhs becomes the output-projection
        # LHS [emb | weighted | h_new], matching w_out's row layout.
        lhs_ref[:, off_h:off_h + Hd] = h_new.astype(jnp.bfloat16)

    return kernel


# ----------------------------------------------------------------------------
# Kernel 2: vocab-tiled output projection (weight-streaming matmul).
# ----------------------------------------------------------------------------
def _out_proj_kernel(lhs_ref, w_ref, b_ref, logits_ref):
    logits_ref[...] = (jnp.dot(lhs_ref[...], w_ref[...],
                               preferred_element_type=jnp.float32)
                       + b_ref[...])


# ----------------------------------------------------------------------------
# Wrappers
# ----------------------------------------------------------------------------
def decoder_step(embedded, decoder_hidden, enc_bse, e_proj_bas, params):
    """embedded (Bp,E) bf16, decoder_hidden (Bp,Hd) f32,
    enc_bse (Bp,S,2He) bf16, e_proj_bas (Bp,A,S) f32 (attention bias folded)."""
    Bp, E = embedded.shape
    Hd = decoder_hidden.shape[1]
    _, S, F2 = enc_bse.shape
    A = e_proj_bas.shape[1]
    Kfused = params['w_gru'].shape[0]
    Hdg = params['w_gru'].shape[1] // 4
    Vp = params['w_out'].shape[1]
    Ep, Wp, Hdp = _round_up(E), _round_up(F2), _round_up(Hd)
    assert Ep + Wp + Hdp == Kfused

    vmem_cap = _vmem_capacity_bytes()
    vmem = pl.BlockSpec(memory_space=pltpu.MemorySpace.VMEM)

    # ---------------- kernel 1: attention + weighted rep + fused GRU ----------------
    k1 = _make_attn_gru_kernel(E=E, F2=F2, Hd=Hd, Ep=Ep, Wp=Wp, Hdg=Hdg)
    k1_inputs = (embedded, decoder_hidden, enc_bse, e_proj_bas,
                 params['w_attn_h'], params['w_gru'], params['b_gru'])
    k1_in_bytes = sum(int(x.size) * x.dtype.itemsize for x in k1_inputs)
    k1_out_bytes = Bp * Kfused * 2 + Bp * Hd * 4
    k1_flops = int(2 * Bp * (Hd * A + S * F2 + Kfused * 4 * Hdg) + 12 * Bp * Hd)
    k1_trans = int(Bp * (A * S + S + 3 * Hd + 1))

    lhs, new_hidden = pl.pallas_call(
        k1,
        out_shape=(jax.ShapeDtypeStruct((Bp, Kfused), jnp.bfloat16),
                   jax.ShapeDtypeStruct((Bp, Hd), jnp.float32)),
        in_specs=[vmem] * len(k1_inputs),
        out_specs=(vmem, vmem),
        compiler_params=pltpu.CompilerParams(
            vmem_limit_bytes=_clamp_vmem(
                2 * (k1_in_bytes + k1_out_bytes) + (4 << 20), vmem_cap)),
        cost_estimate=pl.CostEstimate(
            flops=k1_flops, transcendentals=k1_trans,
            bytes_accessed=int(k1_in_bytes + k1_out_bytes)),
    )(*k1_inputs)

    # ---------------- kernel 2: vocab-tiled output projection ----------------
    TILE_V = _select_vocab_tile(Vp, Kfused, Bp, vmem_cap)
    n_tiles = Vp // TILE_V
    tile_bytes = _vocab_tile_bytes(TILE_V, Kfused, Bp)
    k2_bytes = Kfused * Vp * 2 + Vp * 4 + Bp * Kfused * 2 + Bp * Vp * 4

    # TODO(synk): on v5e, if the xprof trace shows exposed weight DMA, raise the
    #             w_out BlockSpec pipeline depth with pipeline_mode=pl.Buffered(3).
    logits = pl.pallas_call(
        _out_proj_kernel,
        out_shape=jax.ShapeDtypeStruct((Bp, Vp), jnp.float32),
        grid=(n_tiles,),
        in_specs=[pl.BlockSpec((Bp, Kfused), lambda v: (0, 0)),
                  pl.BlockSpec((Kfused, TILE_V), lambda v: (0, v)),
                  pl.BlockSpec((1, TILE_V), lambda v: (0, v))],
        out_specs=pl.BlockSpec((Bp, TILE_V), lambda v: (0, v)),
        compiler_params=pltpu.CompilerParams(
            # "parallel" shards the vocab axis across v7x's 2 TensorCores
            # (no-op on single-TC v5e/v6e).
            dimension_semantics=("parallel",),
            vmem_limit_bytes=_clamp_vmem(tile_bytes + (8 << 20), vmem_cap)),
        cost_estimate=pl.CostEstimate(
            flops=int(2 * Bp * Kfused * Vp), transcendentals=0,
            bytes_accessed=int(k2_bytes)),
    )(lhs, params['w_out'], params['b_out'])
    return logits, new_hidden


def precompute_encoder(encoder_outputs_sbe, params):
    """Once-per-sequence work: batch-major relayout, encoder-side attention
    projection (bias folded), (B,A,S) layout for lane-dense energy math, and
    batch padding to a sublane multiple."""
    enc_bse = jnp.transpose(encoder_outputs_sbe, (1, 0, 2))          # (B, S, 2He)
    B, S, F2 = enc_bse.shape
    Bp = max(8, _round_up(B, 8))
    A = params['w_attn_e'].shape[1]
    e_proj = jnp.dot(enc_bse.reshape(B * S, F2), params['w_attn_e'],
                     preferred_element_type=jnp.float32)
    e_proj = (e_proj + params['b_attn']).reshape(B, S, A)
    e_proj_bas = jnp.transpose(e_proj, (0, 2, 1))                    # (B, A, S)
    # TODO(synk): on v6e/v7x the energy tensor could be bf16 (bf16 VPU/EUP);
    #             kept f32 so the same kernel is numerically safe on v5e.
    return (_pad_batch(enc_bse, Bp).astype(jnp.bfloat16),
            _pad_batch(e_proj_bas, Bp))


def decoder_forward_precomputed(token_ids, decoder_hidden, enc_bse, e_proj_bas, params):
    """Hot per-token path: embedding gather (glue) + the two Pallas kernels."""
    B = token_ids.shape[0]
    Bp = enc_bse.shape[0]
    # embedding lookup + dropout (eval mode -> identity) -- glue
    # TODO(synk): training-mode dropout (random mask) not implemented.
    # TODO(synk): embedding gather could be fused in-kernel via SMEM token ids.
    embedded = jnp.take(params['emb_table'], token_ids, axis=0)      # (B, E) bf16
    embedded = _pad_batch(embedded, Bp)
    hidden_p = _pad_batch(decoder_hidden, Bp)
    logits_p, new_hidden_p = decoder_step(embedded, hidden_p, enc_bse, e_proj_bas, params)
    out_dim = params['emb_table'].shape[0]
    return logits_p[:B, :out_dim], new_hidden_p[:B]


def decoder_forward(token_ids, decoder_hidden, encoder_outputs_sbe, params):
    """Mirrors Decoder.forward.
    token_ids: (B,) int32, decoder_hidden: (B, Hd),
    encoder_outputs_sbe: (S, B, 2*He)  (PyTorch layout)."""
    enc_bse, e_proj_bas = precompute_encoder(encoder_outputs_sbe, params)
    return decoder_forward_precomputed(token_ids, decoder_hidden, enc_bse, e_proj_bas, params)


# ----------------------------------------------------------------------------
# Parameters: random init, fused/padded layouts.
#   w_gru : (Kfused, 4*Hdg)  rows [emb | weighted | hidden] at 128-aligned
#           offsets, gate column blocks [r | z | gi_n | gh_n] (each Hdg wide).
#   w_out : (Kfused, Vp)     same row layout (matches the fused LHS), vocab
#           columns zero-padded to a multiple of 128.
# ----------------------------------------------------------------------------
def make_params(key, output_dim, emb_dim, enc_hid_dim, dec_hid_dim, attn_dim):
    ks = jax.random.split(key, 21)
    s = 0.1
    E, Hd, A, V = emb_dim, dec_hid_dim, attn_dim, output_dim
    F2 = 2 * enc_hid_dim
    Ep, Wp, Hdp = _round_up(E), _round_up(F2), _round_up(Hd)
    Hdg = _round_up(Hd)                      # per-gate column block width
    Kfused = Ep + Wp + Hdp
    Vp = _round_up(V)
    bf = jnp.bfloat16

    def nrm(k, shape):
        return s * jax.random.normal(k, shape, jnp.float32)

    # raw (PyTorch-equivalent) weight pieces
    W_ir_e = nrm(ks[4], (E, Hd)); W_iz_e = nrm(ks[5], (E, Hd)); W_in_e = nrm(ks[6], (E, Hd))
    W_ir_w = nrm(ks[7], (F2, Hd)); W_iz_w = nrm(ks[8], (F2, Hd)); W_in_w = nrm(ks[9], (F2, Hd))
    W_hr = nrm(ks[10], (Hd, Hd)); W_hz = nrm(ks[11], (Hd, Hd)); W_hn = nrm(ks[12], (Hd, Hd))
    b_r = nrm(ks[13], (1, Hd))    # = b_ir + b_hr (merged)
    b_z = nrm(ks[14], (1, Hd))    # = b_iz + b_hz (merged)
    b_in = nrm(ks[15], (1, Hd)); b_hn = nrm(ks[16], (1, Hd))
    W_out_e = nrm(ks[17], (E, V)); W_out_w = nrm(ks[18], (F2, V)); W_out_h = nrm(ks[19], (Hd, V))
    b_out = nrm(ks[20], (1, V))

    off_e, off_w, off_h = 0, Ep, Ep + Wp

    w_gru = jnp.zeros((Kfused, 4 * Hdg), jnp.float32)
    # r gate
    w_gru = w_gru.at[off_e:off_e + E, 0:Hd].set(W_ir_e)
    w_gru = w_gru.at[off_w:off_w + F2, 0:Hd].set(W_ir_w)
    w_gru = w_gru.at[off_h:off_h + Hd, 0:Hd].set(W_hr)
    # z gate
    w_gru = w_gru.at[off_e:off_e + E, Hdg:Hdg + Hd].set(W_iz_e)
    w_gru = w_gru.at[off_w:off_w + F2, Hdg:Hdg + Hd].set(W_iz_w)
    w_gru = w_gru.at[off_h:off_h + Hd, Hdg:Hdg + Hd].set(W_hz)
    # gi_n (input path only)
    w_gru = w_gru.at[off_e:off_e + E, 2 * Hdg:2 * Hdg + Hd].set(W_in_e)
    w_gru = w_gru.at[off_w:off_w + F2, 2 * Hdg:2 * Hdg + Hd].set(W_in_w)
    # gh_n (hidden path only; multiplied by r inside the kernel)
    w_gru = w_gru.at[off_h:off_h + Hd, 3 * Hdg:3 * Hdg + Hd].set(W_hn)

    b_gru = jnp.zeros((1, 4 * Hdg), jnp.float32)
    b_gru = b_gru.at[:, 0:Hd].set(b_r)
    b_gru = b_gru.at[:, Hdg:Hdg + Hd].set(b_z)
    b_gru = b_gru.at[:, 2 * Hdg:2 * Hdg + Hd].set(b_in)
    b_gru = b_gru.at[:, 3 * Hdg:3 * Hdg + Hd].set(b_hn)

    w_out = jnp.zeros((Kfused, Vp), jnp.float32)
    w_out = w_out.at[off_e:off_e + E, 0:V].set(W_out_e)
    w_out = w_out.at[off_w:off_w + F2, 0:V].set(W_out_w)
    w_out = w_out.at[off_h:off_h + Hd, 0:V].set(W_out_h)
    b_out_p = jnp.zeros((1, Vp), jnp.float32).at[:, 0:V].set(b_out)

    return {
        'emb_table': nrm(ks[0], (V, E)).astype(bf),
        'w_attn_h': nrm(ks[1], (Hd, A)).astype(bf),
        'w_attn_e': nrm(ks[2], (F2, A)),          # used once per sequence (f32)
        'b_attn':   nrm(ks[3], (1, A)),
        'w_gru': w_gru.astype(bf),
        'b_gru': b_gru,
        'w_out': w_out.astype(bf),
        'b_out': b_out_p,
    }


# ----------------------------------------------------------------------------
# Pure-JAX reference (same fused weights) for a tolerance check.
# ----------------------------------------------------------------------------
def decoder_reference(token_ids, decoder_hidden, encoder_outputs_sbe, params):
    f32 = jnp.float32
    embedded = jnp.take(params['emb_table'].astype(f32), token_ids, axis=0)
    enc = jnp.transpose(encoder_outputs_sbe, (1, 0, 2)).astype(f32)   # (B, S, F2)
    B, S, F2 = enc.shape
    E = embedded.shape[1]
    Hd = decoder_hidden.shape[1]
    Ep, Wp = _round_up(E), _round_up(F2)
    off_e, off_w, off_h = 0, Ep, Ep + Wp

    h_proj = decoder_hidden @ params['w_attn_h'].astype(f32)          # (B, A)
    e_proj = jnp.einsum('bsf,fa->bsa', enc, params['w_attn_e']) + params['b_attn']
    scores = jnp.sum(jnp.tanh(h_proj[:, None, :] + e_proj), axis=2)   # (B, S)
    attn = jax.nn.softmax(scores, axis=1)
    weighted = jnp.einsum('bs,bsf->bf', attn, enc)                    # (B, F2)

    w_gru = params['w_gru'].astype(f32)
    Hdg = w_gru.shape[1] // 4
    x = jnp.zeros((B, w_gru.shape[0]), f32)
    x = x.at[:, off_e:off_e + E].set(embedded)
    x = x.at[:, off_w:off_w + F2].set(weighted)
    x = x.at[:, off_h:off_h + Hd].set(decoder_hidden)
    gates = x @ w_gru + params['b_gru']
    r = jax.nn.sigmoid(gates[:, 0:Hd])
    z = jax.nn.sigmoid(gates[:, Hdg:Hdg + Hd])
    n = jnp.tanh(gates[:, 2 * Hdg:2 * Hdg + Hd] + r * gates[:, 3 * Hdg:3 * Hdg + Hd])
    h_new = (1.0 - z) * n + z * decoder_hidden

    w_out = params['w_out'].astype(f32)
    y = jnp.zeros((B, w_out.shape[0]), f32)
    y = y.at[:, off_e:off_e + E].set(embedded)
    y = y.at[:, off_w:off_w + F2].set(weighted)
    y = y.at[:, off_h:off_h + Hd].set(h_new)
    V = params['emb_table'].shape[0]
    logits = (y @ w_out + params['b_out'])[:, :V]
    return logits, h_new


if __name__ == "__main__":
    # small shapes consistent with the module
    OUTPUT_DIM = 32   # target vocab
    EMB_DIM = 16
    ENC_HID_DIM = 16  # encoder is bidirectional -> features = 2*ENC_HID_DIM
    DEC_HID_DIM = 32
    ATTN_DIM = 8
    B = 4             # batch
    S = 8             # source sequence length
    N_STEPS = 4       # greedy-decode demo steps

    key = jax.random.PRNGKey(0)
    k_par, k_tok, k_hid, k_enc = jax.random.split(key, 4)

    params = make_params(k_par, OUTPUT_DIM, EMB_DIM, ENC_HID_DIM, DEC_HID_DIM, ATTN_DIM)

    token_ids = jax.random.randint(k_tok, (B,), 0, OUTPUT_DIM, dtype=jnp.int32)
    decoder_hidden = jax.random.normal(k_hid, (B, DEC_HID_DIM), jnp.float32)
    encoder_outputs = jax.random.normal(k_enc, (S, B, 2 * ENC_HID_DIM), jnp.float32)

    # ---- single step, mirroring Decoder.forward ----
    fwd = jax.jit(decoder_forward)
    logits, new_hidden = fwd(token_ids, decoder_hidden, encoder_outputs, params)
    jax.block_until_ready((logits, new_hidden))
    assert logits.shape == (B, OUTPUT_DIM)
    assert new_hidden.shape == (B, DEC_HID_DIM)

    # numerical check vs a pure-JAX reference using the same weights
    ref_logits, ref_hidden = jax.jit(decoder_reference)(
        token_ids, decoder_hidden, encoder_outputs, params)
    assert bool(jnp.allclose(logits, ref_logits, atol=1e-1, rtol=1e-1))
    assert bool(jnp.allclose(new_hidden, ref_hidden, atol=1e-1, rtol=1e-1))

    # ---- multi-step greedy decode: precompute once, scan the fused step ----
    # TODO(synk): for v5e/v6e multi-step decode, keep weights VMEM-resident
    #             across steps (in-kernel decode loop or cross-call prefetch)
    #             instead of re-streaming them every scan iteration.
    enc_bse, e_proj = jax.jit(precompute_encoder)(encoder_outputs, params)

    def one_step(carry, _):
        tok, hid = carry
        lg, hid = decoder_forward_precomputed(tok, hid, enc_bse, e_proj, params)
        nxt = jnp.argmax(lg, axis=-1).astype(jnp.int32)
        return (nxt, hid), lg

    @jax.jit
    def greedy(tok0, hid0):
        (_, hid), all_logits = jax.lax.scan(one_step, (tok0, hid0), xs=None,
                                            length=N_STEPS)
        return all_logits, hid

    all_logits, final_hidden = greedy(token_ids, decoder_hidden)
    jax.block_until_ready((all_logits, final_hidden))
    assert all_logits.shape == (N_STEPS, B, OUTPUT_DIM)
    assert final_hidden.shape == (B, DEC_HID_DIM)

    print("KERNEL_OK")
</pallas_src>

<mosaic_0001>
module attributes {stable_mosaic.version = 11 : i64} {
  func.func @kernel(%arg0: memref<8x16xbf16, #tpu.memory_space<vmem>>, %arg1: memref<8x32xf32, #tpu.memory_space<vmem>>, %arg2: memref<8x8x32xbf16, #tpu.memory_space<vmem>>, %arg3: memref<8x8x8xf32, #tpu.memory_space<vmem>>, %arg4: memref<32x8xbf16, #tpu.memory_space<vmem>>, %arg5: memref<384x512xbf16, #tpu.memory_space<vmem>>, %arg6: memref<1x512xf32, #tpu.memory_space<vmem>>, %arg7: memref<8x384xbf16, #tpu.memory_space<vmem>>, %arg8: memref<8x32xf32, #tpu.memory_space<vmem>>) attributes {dimension_semantics = [], scalar_prefetch = 0 : i64, scratch_operands = 0 : i64, tpu.core_type = #tpu.core_type<tc>} {
    %c0 = arith.constant 0 : index
    %c0_0 = arith.constant 0 : index
    %0 = vector.load %arg0[%c0, %c0_0] : memref<8x16xbf16, #tpu.memory_space<vmem>>, vector<8x16xbf16>
    %c0_1 = arith.constant 0 : index
    %c0_2 = arith.constant 0 : index
    %1 = vector.load %arg1[%c0_1, %c0_2] : memref<8x32xf32, #tpu.memory_space<vmem>>, vector<8x32xf32>
    %2 = arith.truncf %1 : vector<8x32xf32> to vector<8x32xbf16>
    %c0_3 = arith.constant 0 : index
    %c0_4 = arith.constant 0 : index
    %3 = vector.load %arg4[%c0_3, %c0_4] : memref<32x8xbf16, #tpu.memory_space<vmem>>, vector<32x8xbf16>
    %cst = arith.constant dense<0.000000e+00> : vector<8x8xf32>
    %4 = tpu.matmul %2, %3, %cst {dimension_numbers = #tpu.dot_dimension_numbers<[1], [0], [0], [1], [0, 0, 1, 1], [], []>} : vector<8x32xbf16>, vector<32x8xbf16>, vector<8x8xf32> -> vector<8x8xf32>
    %5 = vector.shape_cast %4 : vector<8x8xf32> to vector<8x8x1xf32>
    %c0_5 = arith.constant 0 : index
    %c0_6 = arith.constant 0 : index
    %c0_7 = arith.constant 0 : index
    %6 = vector.load %arg3[%c0_5, %c0_6, %c0_7] : memref<8x8x8xf32, #tpu.memory_space<vmem>>, vector<8x8x8xf32>
    %7 = vector.broadcast %5 : vector<8x8x1xf32> to vector<8x8x8xf32>
    %8 = arith.addf %7, %6 : vector<8x8x8xf32>
    %9 = math.tanh %8 : vector<8x8x8xf32>
    %cst_8 = arith.constant dense<0.000000e+00> : vector<8x8xf32>
    %10 = vector.multi_reduction <add>, %9, %cst_8 [1] : vector<8x8x8xf32> to vector<8x8xf32>
    %cst_9 = arith.constant dense<0xFF800000> : vector<8xf32>
    %11 = vector.multi_reduction <maximumf>, %10, %cst_9 [1] : vector<8x8xf32> to vector<8xf32>
    %12 = vector.shape_cast %11 : vector<8xf32> to vector<8x1xf32>
    %13 = vector.broadcast %12 : vector<8x1xf32> to vector<8x8xf32>
    %14 = arith.subf %10, %13 : vector<8x8xf32>
    %15 = math.exp %14 : vector<8x8xf32>
    %cst_10 = arith.constant dense<0.000000e+00> : vector<8xf32>
    %16 = vector.multi_reduction <add>, %15, %cst_10 [1] : vector<8x8xf32> to vector<8xf32>
    %17 = vector.shape_cast %16 : vector<8xf32> to vector<8x1xf32>
    %18 = tpu.reciprocal %17 {approx = true} : vector<8x1xf32> -> vector<8x1xf32>
    %19 = vector.broadcast %18 : vector<8x1xf32> to vector<8x8xf32>
    %20 = arith.mulf %15, %19 : vector<8x8xf32>
    %c0_11 = arith.constant 0 : index
    %c0_12 = arith.constant 0 : index
    %c0_13 = arith.constant 0 : index
    %21 = vector.load %arg2[%c0_11, %c0_12, %c0_13] : memref<8x8x32xbf16, #tpu.memory_space<vmem>>, vector<8x8x32xbf16>
    %22 = arith.extf %21 : vector<8x8x32xbf16> to vector<8x8x32xf32>
    %23 = vector.shape_cast %20 : vector<8x8xf32> to vector<8x8x1xf32>
    %24 = vector.broadcast %23 : vector<8x8x1xf32> to vector<8x8x32xf32>
    %25 = arith.mulf %24, %22 : vector<8x8x32xf32>
    %cst_14 = arith.constant dense<0.000000e+00> : vector<8x32xf32>
    %26 = vector.multi_reduction <add>, %25, %cst_14 [1] : vector<8x8x32xf32> to vector<8x32xf32>
    %27 = arith.truncf %26 : vector<8x32xf32> to vector<8x32xbf16>
    %cst_15 = arith.constant 0.000000e+00 : bf16
    %28 = vector.broadcast %cst_15 : bf16 to vector<8x384xbf16>
    %c0_16 = arith.constant 0 : index
    %c0_17 = arith.constant 0 : index
    %29 = vector.load %arg7[%c0_16, %c0_17] : memref<8x384xbf16, #tpu.memory_space<vmem>>, vector<8x384xbf16>
    tpu.vector_store %arg7[%c0_16, %c0_17], %28 {strides = array<i32>} : memref<8x384xbf16, #tpu.memory_space<vmem>>, vector<8x384xbf16>,
    %c0_18 = arith.constant 0 : index
    %c0_19 = arith.constant 0 : index
    %30 = vector.load %arg7[%c0_18, %c0_19] : memref<8x384xbf16, #tpu.memory_space<vmem>>, vector<8x16xbf16>
    tpu.vector_store %arg7[%c0_18, %c0_19], %0 {strides = array<i32>} : memref<8x384xbf16, #tpu.memory_space<vmem>>, vector<8x16xbf16>,
    %c0_20 = arith.constant 0 : index
    %c128 = arith.constant 128 : index
    %31 = vector.load %arg7[%c0_20, %c128] : memref<8x384xbf16, #tpu.memory_space<vmem>>, vector<8x32xbf16>
    tpu.vector_store %arg7[%c0_20, %c128], %27 {strides = array<i32>} : memref<8x384xbf16, #tpu.memory_space<vmem>>, vector<8x32xbf16>,
    %c0_21 = arith.constant 0 : index
    %c256 = arith.constant 256 : index
    %32 = vector.load %arg7[%c0_21, %c256] : memref<8x384xbf16, #tpu.memory_space<vmem>>, vector<8x32xbf16>
    tpu.vector_store %arg7[%c0_21, %c256], %2 {strides = array<i32>} : memref<8x384xbf16, #tpu.memory_space<vmem>>, vector<8x32xbf16>,
    %c0_22 = arith.constant 0 : index
    %c0_23 = arith.constant 0 : index
    %33 = vector.load %arg7[%c0_22, %c0_23] : memref<8x384xbf16, #tpu.memory_space<vmem>>, vector<8x384xbf16>
    %c0_24 = arith.constant 0 : index
    %c0_25 = arith.constant 0 : index
    %34 = vector.load %arg5[%c0_24, %c0_25] : memref<384x512xbf16, #tpu.memory_space<vmem>>, vector<384x512xbf16>
    %cst_26 = arith.constant dense<0.000000e+00> : vector<8x512xf32>
    %35 = tpu.matmul %33, %34, %cst_26 {dimension_numbers = #tpu.dot_dimension_numbers<[1], [0], [0], [1], [0, 0, 1, 1], [], []>} : vector<8x384xbf16>, vector<384x512xbf16>, vector<8x512xf32> -> vector<8x512xf32>
    %c0_27 = arith.constant 0 : index
    %c0_28 = arith.constant 0 : index
    %36 = vector.load %arg6[%c0_27, %c0_28] : memref<1x512xf32, #tpu.memory_space<vmem>>, vector<1x512xf32>
    %37 = vector.broadcast %36 : vector<1x512xf32> to vector<8x512xf32>
    %38 = arith.addf %35, %37 : vector<8x512xf32>
    %39 = vector.extract_strided_slice %38 {offsets = [0, 0], sizes = [8, 32], strides = [1, 1]} : vector<8x512xf32> to vector<8x32xf32>
    %40 = arith.negf %39 : vector<8x32xf32>
    %41 = math.exp %40 : vector<8x32xf32>
    %cst_29 = arith.constant 1.000000e+00 : f32
    %42 = vector.broadcast %cst_29 : f32 to vector<8x32xf32>
    %43 = arith.addf %42, %41 : vector<8x32xf32>
    %44 = arith.divf %42, %43 : vector<8x32xf32>
    %45 = vector.extract_strided_slice %38 {offsets = [0, 128], sizes = [8, 32], strides = [1, 1]} : vector<8x512xf32> to vector<8x32xf32>
    %46 = arith.negf %45 : vector<8x32xf32>
    %47 = math.exp %46 : vector<8x32xf32>
    %cst_30 = arith.constant 1.000000e+00 : f32
    %48 = vector.broadcast %cst_30 : f32 to vector<8x32xf32>
    %49 = arith.addf %48, %47 : vector<8x32xf32>
    %50 = arith.divf %48, %49 : vector<8x32xf32>
    %51 = vector.extract_strided_slice %38 {offsets = [0, 256], sizes = [8, 32], strides = [1, 1]} : vector<8x512xf32> to vector<8x32xf32>
    %52 = vector.extract_strided_slice %38 {offsets = [0, 384], sizes = [8, 32], strides = [1, 1]} : vector<8x512xf32> to vector<8x32xf32>
    %53 = arith.mulf %44, %52 : vector<8x32xf32>
    %54 = arith.addf %51, %53 : vector<8x32xf32>
    %55 = math.tanh %54 : vector<8x32xf32>
    %cst_31 = arith.constant 1.000000e+00 : f32
    %56 = vector.broadcast %cst_31 : f32 to vector<8x32xf32>
    %57 = arith.subf %56, %50 : vector<8x32xf32>
    %58 = arith.mulf %57, %55 : vector<8x32xf32>
    %59 = arith.mulf %50, %1 : vector<8x32xf32>
    %60 = arith.addf %58, %59 : vector<8x32xf32>
    %c0_32 = arith.constant 0 : index
    %c0_33 = arith.constant 0 : index
    %61 = vector.load %arg8[%c0_32, %c0_33] : memref<8x32xf32, #tpu.memory_space<vmem>>, vector<8x32xf32>
    tpu.vector_store %arg8[%c0_32, %c0_33], %60 {strides = array<i32>} : memref<8x32xf32, #tpu.memory_space<vmem>>, vector<8x32xf32>,
    %62 = arith.truncf %60 : vector<8x32xf32> to vector<8x32xbf16>
    %c0_34 = arith.constant 0 : index
    %c256_35 = arith.constant 256 : index
    %63 = vector.load %arg7[%c0_34, %c256_35] : memref<8x384xbf16, #tpu.memory_space<vmem>>, vector<8x32xbf16>
    tpu.vector_store %arg7[%c0_34, %c256_35], %62 {strides = array<i32>} : memref<8x384xbf16, #tpu.memory_space<vmem>>, vector<8x32xbf16>,
    return
  }
}

module attributes {stable_mosaic.version = 11 : i64} {
  func.func @_out_proj_kernel(%arg0: i32, %arg1: memref<8x384xbf16, #tpu.memory_space<vmem>>, %arg2: memref<384x128xbf16, #tpu.memory_space<vmem>>, %arg3: memref<1x128xf32, #tpu.memory_space<vmem>>, %arg4: memref<8x128xf32, #tpu.memory_space<vmem>>) attributes {dimension_semantics = [#tpu.dimension_semantics<parallel>], iteration_bounds = array<i64: 1>, scalar_prefetch = 0 : i64, scratch_operands = 0 : i64, tpu.core_type = #tpu.core_type<tc>, window_params = [{pipeline_mode = #tpu.pipeline_mode<synchronous>, transform_indices = @transform_0, window_bounds = array<i64: 8, 384>}, {transform_indices = @transform_1, window_bounds = array<i64: 384, 128>}, {transform_indices = @transform_2, window_bounds = array<i64: 1, 128>}, {transform_indices = @transform_3, window_bounds = array<i64: 8, 128>}]} {
    %c0 = arith.constant 0 : index
    %c0_0 = arith.constant 0 : index
    %0 = vector.load %arg1[%c0, %c0_0] : memref<8x384xbf16, #tpu.memory_space<vmem>>, vector<8x384xbf16>
    %c0_1 = arith.constant 0 : index
    %c0_2 = arith.constant 0 : index
    %1 = vector.load %arg2[%c0_1, %c0_2] : memref<384x128xbf16, #tpu.memory_space<vmem>>, vector<384x128xbf16>
    %cst = arith.constant dense<0.000000e+00> : vector<8x128xf32>
    %2 = tpu.matmul %0, %1, %cst {dimension_numbers = #tpu.dot_dimension_numbers<[1], [0], [0], [1], [0, 0, 1, 1], [], []>} : vector<8x384xbf16>, vector<384x128xbf16>, vector<8x128xf32> -> vector<8x128xf32>
    %c0_3 = arith.constant 0 : index
    %c0_4 = arith.constant 0 : index
    %3 = vector.load %arg3[%c0_3, %c0_4] : memref<1x128xf32, #tpu.memory_space<vmem>>, vector<1x128xf32>
    %4 = vector.broadcast %3 : vector<1x128xf32> to vector<8x128xf32>
    %5 = arith.addf %2, %4 : vector<8x128xf32>
    %c0_5 = arith.constant 0 : index
    %c0_6 = arith.constant 0 : index
    %6 = vector.load %arg4[%c0_5, %c0_6] : memref<8x128xf32, #tpu.memory_space<vmem>>, vector<8x128xf32>
    tpu.vector_store %arg4[%c0_5, %c0_6], %5 {strides = array<i32>} : memref<8x128xf32, #tpu.memory_space<vmem>>, vector<8x128xf32>,
    return
  }
  func.func @transform_0(%arg0: i32) -> (i32, i32) {
    %c0_i32 = arith.constant 0 : i32
    %c0_i32_0 = arith.constant 0 : i32
    %c0_i32_1 = arith.constant 0 : i32
    return %c0_i32, %c0_i32_0 : i32, i32
  }
  func.func @transform_1(%arg0: i32) -> (i32, i32) {
    %c0_i32 = arith.constant 0 : i32
    %c0_i32_0 = arith.constant 0 : i32
    return %c0_i32, %arg0 : i32, i32
  }
  func.func @transform_2(%arg0: i32) -> (i32, i32) {
    %c0_i32 = arith.constant 0 : i32
    %c0_i32_0 = arith.constant 0 : i32
    return %c0_i32, %arg0 : i32, i32
  }
  func.func @transform_3(%arg0: i32) -> (i32, i32) {
    %c0_i32 = arith.constant 0 : i32
    %c0_i32_0 = arith.constant 0 : i32
    return %c0_i32, %arg0 : i32, i32
  }
}

</mosaic_0001>

<llo_original>
// kernel: decoder_forward.3
$region0: #{decoder_forward.3}
  #allocation0 [shape = 'u32[]', space=smem, size = 0x4, offset = 0x4, fixed_abs, tag = 'smem constant byte address 0x4 - core index']
  #allocation1 [shape = 'u32[72,128]{1,0:T(1,128)}', space=vmem, size = 0x9000, scoped, tag = 'internal scratch']
  %s0 = inlined_call_operand.vmem [shape: bf16[8,384], index: 0, kind: input, shape index: {}]
  %s1 = inlined_call_operand.vmem [shape: bf16[384,128], index: 1, kind: input, shape index: {}]
  %s2 = inlined_call_operand.vmem [shape: f32[1,128], index: 2, kind: input, shape index: {}]
  %s3 = inlined_call_operand.vmem [shape: f32[8,128], index: 3, kind: output, shape index: {}]
  %s4 = sld [smem:[#allocation0]]
  $region22: #{decoder_forward.3} parent=0
    _
  %s6 = ssub.s32 1, %s4
  %s7 = scalar_select 0, %s6, %s4
  // Predicated region
  $region2: #{decoder_forward.3} parent=0 // pred_check
    _
  $region3: #{decoder_forward.3} parent=0 // pred_check_branch
    %9 = sbr.rel (0) target = $region5
  $region4: #{decoder_forward.3} parent=0 // pred_region
    _
  $region5: #{decoder_forward.3} parent=0 // pred_fallthru
    _
  // Predicated region
  $region6: #{decoder_forward.3} parent=0 // pred_check
    _
  $region7: #{decoder_forward.3} parent=0 // pred_check_branch
    %11 = sbr.rel (0) target = $region9
  $region8: #{decoder_forward.3} parent=0 // pred_region
    _
  $region9: #{decoder_forward.3} parent=0 // pred_fallthru
    _
  // Predicated region
  $region10: #{decoder_forward.3} parent=0 // pred_check
    _
  $region11: #{decoder_forward.3} parent=0 // pred_check_branch
    %13 = sbr.rel (0) target = $region13
  $region12: #{decoder_forward.3} parent=0 // pred_region
    _
  $region13: #{decoder_forward.3} parent=0 // pred_fallthru
    _
  %v14 = vld [vmem:[%s0] sm:$0xff]
  %v15 = vld [vmem:[%s0 + $0x8] sm:$0xf]
  %v16 = vld [vmem:[%s1] sm:$0xf]
  %v17 = vld [vmem:[%s1 + $0x4] sm:$0xf]
  %v18 = vld [vmem:[%s1 + $0x8] sm:$0xf]
  %v19 = vld [vmem:[%s1 + $0xc] sm:$0xf]
  %v20 = vld [vmem:[%s1 + $0x10] sm:$0xf]
  %v21 = vld [vmem:[%s1 + $0x14] sm:$0xf]
  %v22 = vld [vmem:[%s1 + $0x18] sm:$0xf]
  %v23 = vld [vmem:[%s1 + $0x1c] sm:$0xf]
  %v24 = vld [vmem:[%s1 + $0x20] sm:$0xf]
  %v25 = vld [vmem:[%s1 + $0x24] sm:$0xf]
  %v26 = vld [vmem:[%s1 + $0x28] sm:$0xf]
  %v27 = vld [vmem:[%s1 + $0x2c] sm:$0xf]
  %v28 = vld [vmem:[%s1 + $0x30] sm:$0xf]
  %v29 = vld [vmem:[%s1 + $0x34] sm:$0xf]
  %v30 = vld [vmem:[%s1 + $0x38] sm:$0xf]
  %v31 = vld [vmem:[%s1 + $0x3c] sm:$0xf]
  %v32 = vld [vmem:[%s1 + $0x40] sm:$0xf]
  %v33 = vld [vmem:[%s1 + $0x44] sm:$0xf]
  %v34 = vld [vmem:[%s1 + $0x48] sm:$0xf]
  %v35 = vld [vmem:[%s1 + $0x4c] sm:$0xf]
  %v36 = vld [vmem:[%s1 + $0x50] sm:$0xf]
  %v37 = vld [vmem:[%s1 + $0x54] sm:$0xf]
  %v38 = vld [vmem:[%s1 + $0x58] sm:$0xf]
  %v39 = vld [vmem:[%s1 + $0x5c] sm:$0xf]
  %v40 = vld [vmem:[%s1 + $0x60] sm:$0xf]
  %v41 = vld [vmem:[%s1 + $0x64] sm:$0xf]
  %v42 = vld [vmem:[%s1 + $0x68] sm:$0xf]
  %v43 = vld [vmem:[%s1 + $0x6c] sm:$0xf]
  %v44 = vld [vmem:[%s1 + $0x70] sm:$0xf]
  %v45 = vld [vmem:[%s1 + $0x74] sm:$0xf]
  %v46 = vld [vmem:[%s1 + $0x78] sm:$0xf]
  %v47 = vld [vmem:[%s1 + $0x7c] sm:$0xf]
  %v48 = vld [vmem:[%s1 + $0x80] sm:$0xf]
  %v49 = vld [vmem:[%s1 + $0x84] sm:$0xf]
  %v50 = vld [vmem:[%s1 + $0x88] sm:$0xf]
  %v51 = vld [vmem:[%s1 + $0x8c] sm:$0xf]
  %v52 = vld [vmem:[%s1 + $0x90] sm:$0xf]
  %v53 = vld [vmem:[%s1 + $0x94] sm:$0xf]
  %v54 = vld [vmem:[%s1 + $0x98] sm:$0xf]
  %v55 = vld [vmem:[%s1 + $0x9c] sm:$0xf]
  %v56 = vld [vmem:[%s1 + $0xa0] sm:$0xf]
  %v57 = vld [vmem:[%s1 + $0xa4] sm:$0xf]
  %v58 = vld [vmem:[%s1 + $0xa8] sm:$0xf]
  %v59 = vld [vmem:[%s1 + $0xac] sm:$0xf]
  %v60 = vld [vmem:[%s1 + $0xb0] sm:$0xf]
  %v61 = vld [vmem:[%s1 + $0xb4] sm:$0xf]
  %v62 = vld [vmem:[%s1 + $0xb8] sm:$0xf]
  %v63 = vld [vmem:[%s1 + $0xbc] sm:$0xf]
  %v64 = vld [vmem:[%s2] sm:$0x1]
  %v66 = vperm.slane %v64, 0
  %v70 = vunpack.c.l.b16 %v14
  %v71 = vunpack.c.h.b16 %v14
  %v72 = vunpack.c.l.b16 %v15
  %v73 = vpack.c.b16 %v70, %v70
  %v74 = vpack.c.b16 %v71, %v71
  %v75 = vpack.c.b16 %v72, %v72
  %v127 = vunpack.c.l.b16 %v16
  %v128 = vunpack.c.l.b16 %v17
  %v129 = vunpack.c.l.b16 %v18
  %v130 = vunpack.c.l.b16 %v19
  %v131 = vunpack.c.l.b16 %v20
  %v132 = vunpack.c.l.b16 %v21
  %v133 = vunpack.c.l.b16 %v22
  %v134 = vunpack.c.l.b16 %v23
  %v135 = vunpack.c.l.b16 %v24
  %v136 = vunpack.c.l.b16 %v25
  %v137 = vunpack.c.l.b16 %v26
  %v138 = vunpack.c.l.b16 %v27
  %v139 = vunpack.c.l.b16 %v28
  %v140 = vunpack.c.l.b16 %v29
  %v141 = vunpack.c.l.b16 %v30
  %v142 = vunpack.c.l.b16 %v31
  %v143 = vunpack.c.l.b16 %v32
  %v144 = vunpack.c.l.b16 %v33
  %v145 = vunpack.c.l.b16 %v34
  %v146 = vunpack.c.l.b16 %v35
  %v147 = vunpack.c.l.b16 %v36
  %v148 = vunpack.c.l.b16 %v37
  %v149 = vunpack.c.l.b16 %v38
  %v150 = vunpack.c.l.b16 %v39
  %v151 = vunpack.c.l.b16 %v40
  %v152 = vunpack.c.l.b16 %v41
  %v153 = vunpack.c.l.b16 %v42
  %v154 = vunpack.c.l.b16 %v43
  %v155 = vunpack.c.l.b16 %v44
  %v156 = vunpack.c.l.b16 %v45
  %v157 = vunpack.c.l.b16 %v46
  %v158 = vunpack.c.l.b16 %v47
  %v159 = vunpack.c.l.b16 %v48
  %v160 = vunpack.c.l.b16 %v49
  %v161 = vunpack.c.l.b16 %v50
  %v162 = vunpack.c.l.b16 %v51
  %v163 = vunpack.c.l.b16 %v52
  %v164 = vunpack.c.l.b16 %v53
  %v165 = vunpack.c.l.b16 %v54
  %v166 = vunpack.c.l.b16 %v55
  %v167 = vunpack.c.l.b16 %v56
  %v168 = vunpack.c.l.b16 %v57
  %v169 = vunpack.c.l.b16 %v58
  %v170 = vunpack.c.l.b16 %v59
  %v171 = vunpack.c.l.b16 %v60
  %v172 = vunpack.c.l.b16 %v61
  %v173 = vunpack.c.l.b16 %v62
  %v174 = vunpack.c.l.b16 %v63
  %v175 = vpack.c.b16 %v128, %v127
  %v176 = vpack.c.b16 %v130, %v129
  %v177 = vpack.c.b16 %v132, %v131
  %v178 = vpack.c.b16 %v134, %v133
  %v179 = vpack.c.b16 %v136, %v135
  %v180 = vpack.c.b16 %v138, %v137
  %v181 = vpack.c.b16 %v140, %v139
  %v182 = vpack.c.b16 %v142, %v141
  %v183 = vpack.c.b16 %v144, %v143
  %v184 = vpack.c.b16 %v146, %v145
  %v185 = vpack.c.b16 %v148, %v147
  %v186 = vpack.c.b16 %v150, %v149
  %v187 = vpack.c.b16 %v152, %v151
  %v188 = vpack.c.b16 %v154, %v153
  %v189 = vpack.c.b16 %v156, %v155
  %v190 = vpack.c.b16 %v158, %v157
  %v191 = vpack.c.b16 %v160, %v159
  %v192 = vpack.c.b16 %v162, %v161
  %v193 = vpack.c.b16 %v164, %v163
  %v194 = vpack.c.b16 %v166, %v165
  %v195 = vpack.c.b16 %v168, %v167
  %v196 = vpack.c.b16 %v170, %v169
  %v197 = vpack.c.b16 %v172, %v171
  %v198 = vpack.c.b16 %v174, %v173
  %223 = vmatpush.bf16.msra.mxu0 %v182
  %224 = vmatpush.bf16.msra.mxu0 %v181
  %225 = vmatpush.bf16.msra.mxu0 %v180
  %226 = vmatpush.bf16.msra.mxu0 %v179
  %227 = vmatpush.bf16.msra.mxu0 %v178
  %228 = vmatpush.bf16.msra.mxu0 %v177
  %229 = vmatpush.bf16.msra.mxu0 %v176
  %230 = vmatpush.bf16.msra.mxu0 %v175
  %231 = vmatmul.bf16.gmra.mxu0 %v73
  %v232 = vpop.f32.mrf.mxu0
  %v233 = vadd.f32 %v66, %v232
  %v234 = vpop.f32.mrf.mxu0
  %235 = vdwg.mxu0
  %236 = vmatpush.bf16.msra.mxu0 %v190
  %237 = vmatpush.bf16.msra.mxu0 %v189
  %238 = vmatpush.bf16.msra.mxu0 %v188
  %239 = vmatpush.bf16.msra.mxu0 %v187
  %240 = vmatpush.bf16.msra.mxu0 %v186
  %241 = vmatpush.bf16.msra.mxu0 %v185
  %242 = vmatpush.bf16.msra.mxu0 %v184
  %243 = vmatpush.bf16.msra.mxu0 %v183
  %244 = vmatmul.bf16.gmra.mxu0 %v74
  %v245 = vpop.f32.mrf.mxu0
  %v246 = vadd.f32 %v233, %v245
  %v247 = vpop.f32.mrf.mxu0
  %248 = vdwg.mxu0
  %249 = vmatpush.bf16.msra.mxu0 %v198
  %250 = vmatpush.bf16.msra.mxu0 %v197
  %251 = vmatpush.bf16.msra.mxu0 %v196
  %252 = vmatpush.bf16.msra.mxu0 %v195
  %253 = vmatpush.bf16.msra.mxu0 %v194
  %254 = vmatpush.bf16.msra.mxu0 %v193
  %255 = vmatpush.bf16.msra.mxu0 %v192
  %256 = vmatpush.bf16.msra.mxu0 %v191
  %257 = vmatmul.bf16.gmra.mxu0 %v75
  %v258 = vpop.f32.mrf.mxu0
  %v259 = vadd.f32 %v246, %v258
  %v260 = vpop.f32.mrf.mxu0
  %261 = vdwg.mxu0
  %262 = vst [vmem:[%s3] sm:$0xff] %v259
  // Predicated region
  $region14: #{decoder_forward.3} parent=0 // pred_check
    _
  $region15: #{decoder_forward.3} parent=0 // pred_check_branch
    %264 = sbr.rel (0) target = $region17
  $region16: #{decoder_forward.3} parent=0 // pred_region
    _
  $region17: #{decoder_forward.3} parent=0 // pred_fallthru
    _
  // Predicated region
  $region18: #{decoder_forward.3} parent=0 // pred_check
    _
  $region19: #{decoder_forward.3} parent=0 // pred_check_branch
    %266 = sbr.rel (0) target = $region21
  $region20: #{decoder_forward.3} parent=0 // pred_region
    _
  $region21: #{decoder_forward.3} parent=0 // pred_fallthru
    _

// kernel: decoder_forward.2
$region0: #{decoder_forward.2}
  #allocation0 [shape = 'u32[]', space=smem, size = 0x4, offset = 0x4, fixed_abs, tag = 'smem constant byte address 0x4 - core index']
  #allocation1 [shape = 'u32[72,128]{1,0:T(1,128)}', space=vmem, size = 0x9000, scoped, tag = 'internal scratch']
  %s0 = inlined_call_operand.vmem [shape: bf16[8,16], index: 0, kind: input, shape index: {}]
  %s1 = inlined_call_operand.vmem [shape: f32[8,32], index: 1, kind: input, shape index: {}]
  %s2 = inlined_call_operand.vmem [shape: bf16[8,8,32], index: 2, kind: input, shape index: {}]
  %s3 = inlined_call_operand.vmem [shape: f32[8,8,8], index: 3, kind: input, shape index: {}]
  %s4 = inlined_call_operand.vmem [shape: bf16[32,8], index: 4, kind: input, shape index: {}]
  %s5 = inlined_call_operand.hbm [shape: bf16[384,512], index: 5, kind: input, shape index: {}]
  %s6 = inlined_call_operand.vmem [shape: f32[1,512], index: 6, kind: input, shape index: {}]
  %s7 = inlined_call_operand.vmem [shape: bf16[8,384], index: 7, kind: output, shape index: {0}]
  %s8 = inlined_call_operand.vmem [shape: f32[8,32], index: 8, kind: output, shape index: {1}]
  %9 = xla_tuple %s7, %s8
  %s10 = sld [smem:[#allocation0]]
  $region50: #{decoder_forward.2} parent=0
    _
  %s12 = ssub.s32 1, %s10
  %s13 = scalar_select 0, %s12, %s10
  $region1: #{decoder_forward.2} parent=0
    #allocation2 [shape = 'u8[393216]{0}', space=vmem, size = 0x60000, scoped, tag = 'input window, operand 5, single buffered']
    #allocation3 [shape = 's32[1]{0}', space=sflag, size = 0x4, scoped, tag = 'scoped memory for decoder_forward.2']
    %14 = vsyncpa [#allocation3], 0
    // Predicated region
    $region2: #{decoder_forward.2} parent=1 // pred_check
      _
    $region3: #{decoder_forward.2} parent=1 // pred_check_branch
      %16 = sbr.rel (0) target = $region5
    $region4: #{decoder_forward.2} parent=1 // pred_region
      _
    $region5: #{decoder_forward.2} parent=1 // pred_fallthru
      _
    // Predicated region
    $region6: #{decoder_forward.2} parent=1 // pred_check
      _
    $region7: #{decoder_forward.2} parent=1 // pred_check_branch
      %18 = sbr.rel (0) target = $region9
    $region8: #{decoder_forward.2} parent=1 // pred_region
      _
    $region9: #{decoder_forward.2} parent=1 // pred_fallthru
      _
    // Predicated region
    $region10: #{decoder_forward.2} parent=1 // pred_check
      _
    $region11: #{decoder_forward.2} parent=1 // pred_check_branch
      %20 = sbr.rel (0) target = $region13
    $region12: #{decoder_forward.2} parent=1 // pred_region
      _
    $region13: #{decoder_forward.2} parent=1 // pred_fallthru
      _
    // Predicated region
    $region14: #{decoder_forward.2} parent=1 // pred_check
      _
    $region15: #{decoder_forward.2} parent=1 // pred_check_branch
      %22 = sbr.rel (0) target = $region17
    $region16: #{decoder_forward.2} parent=1 // pred_region
      _
    $region17: #{decoder_forward.2} parent=1 // pred_fallthru
      _
    // Predicated region
    $region18: #{decoder_forward.2} parent=1 // pred_check
      _
    $region19: #{decoder_forward.2} parent=1 // pred_check_branch
      %24 = sbr.rel (0) target = $region21
    $region20: #{decoder_forward.2} parent=1 // pred_region
      _
    $region21: #{decoder_forward.2} parent=1 // pred_fallthru
      _
    // Predicated region
    $region22: #{decoder_forward.2} parent=1 // pred_check
      _
    $region23: #{decoder_forward.2} parent=1 // pred_check_branch
      %26 = sbr.rel (0) target = $region25
    $region24: #{decoder_forward.2} parent=1 // pred_region
      %28 = vsyncadd [#allocation3], 0
      %s29 = sshll.u32 %s5, 4
      %s30 = int_to_ptr.hbm [resolvable:$true] %s29
      %s31 = sshll.u32 [#allocation2], 4
      %s32 = int_to_ptr.vmem [resolvable:$true] %s31
      %37 = dma.hbm_to_vmem [thread:$0]  %s30, 12288, %s32, [#allocation3], 256, 256, 16
    $region25: #{decoder_forward.2} parent=1 // pred_fallthru
      _
    // Predicated region
    $region26: #{decoder_forward.2} parent=1 // pred_check
      _
    $region27: #{decoder_forward.2} parent=1 // pred_check_branch
      %39 = sbr.rel (0) target = $region29
    $region28: #{decoder_forward.2} parent=1 // pred_region
      _
    $region29: #{decoder_forward.2} parent=1 // pred_fallthru
      _
    // Predicated region
    $region30: #{decoder_forward.2} parent=1 // pred_check
      _
    $region31: #{decoder_forward.2} parent=1 // pred_check_branch
      %41 = sbr.rel (0) target = $region33
    $region32: #{decoder_forward.2} parent=1 // pred_region
      %43 = dma.done [#allocation3], 12288
    $region33: #{decoder_forward.2} parent=1 // pred_fallthru
      _
    %v45 = vld [vmem:[%s0] sm:$0xf]
    %v46 = vld [vmem:[%s1] sm:$0xff]
    %v47 = vpack.c.bf16 %v46, %v46
    %v48 = vld [vmem:[%s4] sm:$0xf]
    %v49 = vld [vmem:[%s4 + $0x4] sm:$0xf]
    %v50 = vld [vmem:[%s4 + $0x8] sm:$0xf]
    %v51 = vld [vmem:[%s4 + $0xc] sm:$0xf]
    %v56 = vunpack.c.l.b16 %v48
    %v57 = vunpack.c.l.b16 %v49
    %v58 = vunpack.c.l.b16 %v50
    %v59 = vunpack.c.l.b16 %v51
    %v60 = vpack.c.b16 %v57, %v56
    %v61 = vpack.c.b16 %v59, %v58
    %vm64 = vcmask 261120
    %v66 = vsel %vm64, %v47, 0
    %68 = vmatpush.bf16.msra.mxu0 0
    %69 = vmatpush.bf16.msra.mxu0 0
    %70 = vmatpush.bf16.msra.mxu0 0
    %71 = vmatpush.bf16.msra.mxu0 0
    %72 = vmatpush.bf16.msra.mxu0 0
    %73 = vmatpush.bf16.msra.mxu0 0
    %74 = vmatpush.bf16.msra.mxu0 %v61
    %75 = vmatpush.bf16.msra.mxu0 %v60
    %76 = vmatmul.bf16.gmra.mxu0 %v66
    %v77 = vpop.f32.mrf.mxu0
    %v78 = vadd.f32 0.0, %v77
    %v79 = vpop.f32.mrf.mxu0
    %80 = vdwg.mxu0
    %v81 = vperm.slane %v78, 0
    %v82 = vlaneseq
    %v83 = vshrl.u32 %v82, 7
    %85 = vset.pattern.permute.xlu0 %v83
    %86 = vperm.xlu0 %85, %v81
    %v87 = vpop.permute.xlu0 %86
    %v88 = vperm.slane %v78, 1
    %v89 = vlaneseq
    %v90 = vshrl.u32 %v89, 7
    %92 = vset.pattern.permute.xlu0 %v90
    %93 = vperm.xlu0 %92, %v88
    %v94 = vpop.permute.xlu0 %93
    %v95 = vperm.slane %v78, 2
    %v96 = vlaneseq
    %v97 = vshrl.u32 %v96, 7
    %99 = vset.pattern.permute.xlu0 %v97
    %100 = vperm.xlu0 %99, %v95
    %v101 = vpop.permute.xlu0 %100
    %v102 = vperm.slane %v78, 3
    %v103 = vlaneseq
    %v104 = vshrl.u32 %v103, 7
    %106 = vset.pattern.permute.xlu0 %v104
    %107 = vperm.xlu0 %106, %v102
    %v108 = vpop.permute.xlu0 %107
    %v109 = vperm.slane %v78, 4
    %v110 = vlaneseq
    %v111 = vshrl.u32 %v110, 7
    %113 = vset.pattern.permute.xlu0 %v111
    %114 = vperm.xlu0 %113, %v109
    %v115 = vpop.permute.xlu0 %114
    %v116 = vperm.slane %v78, 5
    %v117 = vlaneseq
    %v118 = vshrl.u32 %v117, 7
    %120 = vset.pattern.permute.xlu0 %v118
    %121 = vperm.xlu0 %120, %v116
    %v122 = vpop.permute.xlu0 %121
    %v123 = vperm.slane %v78, 6
    %v124 = vlaneseq
    %v125 = vshrl.u32 %v124, 7
    %127 = vset.pattern.permute.xlu0 %v125
    %128 = vperm.xlu0 %127, %v123
    %v129 = vpop.permute.xlu0 %128
    %v130 = vperm.slane %v78, 7
    %v131 = vlaneseq
    %v132 = vshrl.u32 %v131, 7
    %134 = vset.pattern.permute.xlu0 %v132
    %135 = vperm.xlu0 %134, %v130
    %v136 = vpop.permute.xlu0 %135
    %v137 = vld [vmem:[%s3] sm:$0xff]
    %v138 = vld [vmem:[%s3 + $0x8] sm:$0xff]
    %v139 = vld [vmem:[%s3 + $0x10] sm:$0xff]
    %v140 = vld [vmem:[%s3 + $0x18] sm:$0xff]
    %v141 = vld [vmem:[%s3 + $0x20] sm:$0xff]
    %v142 = vld [vmem:[%s3 + $0x28] sm:$0xff]
    %v143 = vld [vmem:[%s3 + $0x30] sm:$0xff]
    %v144 = vld [vmem:[%s3 + $0x38] sm:$0xff]
    %v145 = vadd.f32 %v87, %v137
    %v146 = vadd.f32 %v94, %v138
    %v147 = vadd.f32 %v101, %v139
    %v148 = vadd.f32 %v108, %v140
    %v149 = vadd.f32 %v115, %v141
    %v150 = vadd.f32 %v122, %v142
    %v151 = vadd.f32 %v129, %v143
    %v152 = vadd.f32 %v136, %v144
    %v153 = vtanh.pop %v145
    %v154 = vtanh.pop %v146
    %v155 = vtanh.pop %v147
    %v156 = vtanh.pop %v148
    %v157 = vtanh.pop %v149
    %v158 = vtanh.pop %v150
    %v159 = vtanh.pop %v151
    %v160 = vtanh.pop %v152
    %vm161 = vcmask 64512
    %v162 = vsel %vm161, %v153, 0.0
    %v163 = vrot.slane %v162, 4
    %v164 = vadd.f32 %v162, %v163
    %v165 = vrot.slane %v164, 2
    %v166 = vadd.f32 %v164, %v165
    %v167 = vrot.slane %v166, 1
    %v168 = vadd.f32 %v166, %v167
    %v169 = vsel %vm161, %v154, 0.0
    %v170 = vrot.slane %v169, 4
    %v171 = vadd.f32 %v169, %v170
    %v172 = vrot.slane %v171, 2
    %v173 = vadd.f32 %v171, %v172
    %v174 = vrot.slane %v173, 1
    %v175 = vadd.f32 %v173, %v174
    %v176 = vsel %vm161, %v155, 0.0
    %v177 = vrot.slane %v176, 4
    %v178 = vadd.f32 %v176, %v177
    %v179 = vrot.slane %v178, 2
    %v180 = vadd.f32 %v178, %v179
    %v181 = vrot.slane %v180, 1
    %v182 = vadd.f32 %v180, %v181
    %v183 = vsel %vm161, %v156, 0.0
    %v184 = vrot.slane %v183, 4
    %v185 = vadd.f32 %v183, %v184
    %v186 = vrot.slane %v185, 2
    %v187 = vadd.f32 %v185, %v186
    %v188 = vrot.slane %v187, 1
    %v189 = vadd.f32 %v187, %v188
    %v190 = vsel %vm161, %v157, 0.0
    %v191 = vrot.slane %v190, 4
    %v192 = vadd.f32 %v190, %v191
    %v193 = vrot.slane %v192, 2
    %v194 = vadd.f32 %v192, %v193
    %v195 = vrot.slane %v194, 1
    %v196 = vadd.f32 %v194, %v195
    %v197 = vsel %vm161, %v158, 0.0
    %v198 = vrot.slane %v197, 4
    %v199 = vadd.f32 %v197, %v198
    %v200 = vrot.slane %v199, 2
    %v201 = vadd.f32 %v199, %v200
    %v202 = vrot.slane %v201, 1
    %v203 = vadd.f32 %v201, %v202
    %v204 = vsel %vm161, %v159, 0.0
    %v205 = vrot.slane %v204, 4
    %v206 = vadd.f32 %v204, %v205
    %v207 = vrot.slane %v206, 2
    %v208 = vadd.f32 %v206, %v207
    %v209 = vrot.slane %v208, 1
    %v210 = vadd.f32 %v208, %v209
    %v211 = vsel %vm161, %v160, 0.0
    %v212 = vrot.slane %v211, 4
    %v213 = vadd.f32 %v211, %v212
    %v214 = vrot.slane %v213, 2
    %v215 = vadd.f32 %v213, %v214
    %v216 = vrot.slane %v215, 1
    %v217 = vadd.f32 %v215, %v216
    %vm226 = vcmask 1041409
    %v227 = vsel %vm226, %v175, %v168
    %vm228 = vcmask 1042434
    %v229 = vsel %vm228, %v182, %v227
    %vm230 = vcmask 1043459
    %v231 = vsel %vm230, %v189, %v229
    %vm232 = vcmask 1044484
    %v233 = vsel %vm232, %v196, %v231
    %vm234 = vcmask 1045509
    %v235 = vsel %vm234, %v203, %v233
    %vm236 = vcmask 1046534
    %v237 = vsel %vm236, %v210, %v235
    %vm238 = vcmask 1047559
    %v239 = vsel %vm238, %v217, %v237
    %v241 = vsel %vm161, %v239, -inf
    %242 = vmax.xlane.f32.xlu0 %v241
    %v243 = vpop.xlane.xlu0 %242
    %v245 = vrot.slane %v243, 1
    %v246 = vrot.slane %v243, 2
    %v247 = vrot.slane %v243, 3
    %v248 = vrot.slane %v243, 4
    %v249 = vrot.slane %v243, 5
    %v250 = vrot.slane %v243, 6
    %v251 = vrot.slane %v243, 7
    %v260 = vsub.f32 %v168, %v243
    %v261 = vsub.f32 %v175, %v245
    %v262 = vsub.f32 %v182, %v246
    %v263 = vsub.f32 %v189, %v247
    %v264 = vsub.f32 %v196, %v248
    %v265 = vsub.f32 %v203, %v249
    %v266 = vsub.f32 %v210, %v250
    %v267 = vsub.f32 %v217, %v251
    %v268 = vmul.f32 %v260, 1.442695
    %v269 = vpow.pop %v268
    %v270 = vmul.f32 %v261, 1.442695
    %v271 = vpow.pop %v270
    %v272 = vmul.f32 %v262, 1.442695
    %v273 = vpow.pop %v272
    %v274 = vmul.f32 %v263, 1.442695
    %v275 = vpow.pop %v274
    %v276 = vmul.f32 %v264, 1.442695
    %v277 = vpow.pop %v276
    %v278 = vmul.f32 %v265, 1.442695
    %v279 = vpow.pop %v278
    %v280 = vmul.f32 %v266, 1.442695
    %v281 = vpow.pop %v280
    %v282 = vmul.f32 %v267, 1.442695
    %v283 = vpow.pop %v282
    %v292 = vrot.slane %v271, 7
    %v293 = vsel %vm226, %v292, %v269
    %v294 = vrot.slane %v273, 6
    %v295 = vsel %vm228, %v294, %v293
    %v296 = vrot.slane %v275, 5
    %v297 = vsel %vm230, %v296, %v295
    %v298 = vrot.slane %v277, 4
    %v299 = vsel %vm232, %v298, %v297
    %v300 = vrot.slane %v279, 3
    %v301 = vsel %vm234, %v300, %v299
    %v302 = vrot.slane %v281, 2
    %v303 = vsel %vm236, %v302, %v301
    %v304 = vrot.slane %v283, 1
    %v305 = vsel %vm238, %v304, %v303
    %v307 = vsel %vm161, %v305, 0.0
    %308 = vadd.xlane.f32.xlu0 %v307
    %v309 = vpop.xlane.xlu0 %308
    %v310 = vrcp.pop %v309
    %v312 = vrot.slane %v310, 1
    %v313 = vrot.slane %v310, 2
    %v314 = vrot.slane %v310, 3
    %v315 = vrot.slane %v310, 4
    %v316 = vrot.slane %v310, 5
    %v317 = vrot.slane %v310, 6
    %v318 = vrot.slane %v310, 7
    %v327 = vmul.f32 %v269, %v310
    %v328 = vmul.f32 %v271, %v312
    %v329 = vmul.f32 %v273, %v313
    %v330 = vmul.f32 %v275, %v314
    %v331 = vmul.f32 %v277, %v315
    %v332 = vmul.f32 %v279, %v316
    %v333 = vmul.f32 %v281, %v317
    %v334 = vmul.f32 %v283, %v318
    %v335 = vld [vmem:[%s2] sm:$0xf]
    %v336 = vld [vmem:[%s2 + $0x4] sm:$0xf]
    %v337 = vld [vmem:[%s2 + $0x8] sm:$0xf]
    %v338 = vld [vmem:[%s2 + $0xc] sm:$0xf]
    %v339 = vld [vmem:[%s2 + $0x10] sm:$0xf]
    %v340 = vld [vmem:[%s2 + $0x14] sm:$0xf]
    %v341 = vld [vmem:[%s2 + $0x18] sm:$0xf]
    %v342 = vld [vmem:[%s2 + $0x1c] sm:$0xf]
    %v343 = vunpack.c.l.bf16 %v335
    %v344 = vunpack.c.l.bf16 %v336
    %v345 = vunpack.c.l.bf16 %v337
    %v346 = vunpack.c.l.bf16 %v338
    %v347 = vunpack.c.l.bf16 %v339
    %v348 = vunpack.c.l.bf16 %v340
    %v349 = vunpack.c.l.bf16 %v341
    %v350 = vunpack.c.l.bf16 %v342
    %v351 = vperm.slane %v327, 0
    %v352 = vlaneseq
    %v353 = vshrl.u32 %v352, 7
    %355 = vset.pattern.permute.xlu0 %v353
    %356 = vperm.xlu0 %355, %v351
    %v357 = vpop.permute.xlu0 %356
    %v358 = vperm.slane %v328, 0
    %v359 = vlaneseq
    %v360 = vshrl.u32 %v359, 7
    %362 = vset.pattern.permute.xlu0 %v360
    %363 = vperm.xlu0 %362, %v358
    %v364 = vpop.permute.xlu0 %363
    %v365 = vperm.slane %v329, 0
    %v366 = vlaneseq
    %v367 = vshrl.u32 %v366, 7
    %369 = vset.pattern.permute.xlu0 %v367
    %370 = vperm.xlu0 %369, %v365
    %v371 = vpop.permute.xlu0 %370
    %v372 = vperm.slane %v330, 0
    %v373 = vlaneseq
    %v374 = vshrl.u32 %v373, 7
    %376 = vset.pattern.permute.xlu0 %v374
    %377 = vperm.xlu0 %376, %v372
    %v378 = vpop.permute.xlu0 %377
    %v379 = vperm.slane %v331, 0
    %v380 = vlaneseq
    %v381 = vshrl.u32 %v380, 7
    %383 = vset.pattern.permute.xlu0 %v381
    %384 = vperm.xlu0 %383, %v379
    %v385 = vpop.permute.xlu0 %384
    %v386 = vperm.slane %v332, 0
    %v387 = vlaneseq
    %v388 = vshrl.u32 %v387, 7
    %390 = vset.pattern.permute.xlu0 %v388
    %391 = vperm.xlu0 %390, %v386
    %v392 = vpop.permute.xlu0 %391
    %v393 = vperm.slane %v333, 0
    %v394 = vlaneseq
    %v395 = vshrl.u32 %v394, 7
    %397 = vset.pattern.permute.xlu0 %v395
    %398 = vperm.xlu0 %397, %v393
    %v399 = vpop.permute.xlu0 %398
    %v400 = vperm.slane %v334, 0
    %v401 = vlaneseq
    %v402 = vshrl.u32 %v401, 7
    %404 = vset.pattern.permute.xlu0 %v402
    %405 = vperm.xlu0 %404, %v400
    %v406 = vpop.permute.xlu0 %405
    %v407 = vmul.f32 %v357, %v343
    %v408 = vmul.f32 %v364, %v344
    %v409 = vmul.f32 %v371, %v345
    %v410 = vmul.f32 %v378, %v346
    %v411 = vmul.f32 %v385, %v347
    %v412 = vmul.f32 %v392, %v348
    %v413 = vmul.f32 %v399, %v349
    %v414 = vmul.f32 %v406, %v350
    %v415 = vsel %vm64, %v407, 0.0
    %v416 = vrot.slane %v415, 4
    %v417 = vadd.f32 %v415, %v416
    %v418 = vrot.slane %v417, 2
    %v419 = vadd.f32 %v417, %v418
    %v420 = vrot.slane %v419, 1
    %v421 = vadd.f32 %v419, %v420
    %v422 = vsel %vm64, %v408, 0.0
    %v423 = vrot.slane %v422, 4
    %v424 = vadd.f32 %v422, %v423
    %v425 = vrot.slane %v424, 2
    %v426 = vadd.f32 %v424, %v425
    %v427 = vrot.slane %v426, 1
    %v428 = vadd.f32 %v426, %v427
    %v429 = vsel %vm64, %v409, 0.0
    %v430 = vrot.slane %v429, 4
    %v431 = vadd.f32 %v429, %v430
    %v432 = vrot.slane %v431, 2
    %v433 = vadd.f32 %v431, %v432
    %v434 = vrot.slane %v433, 1
    %v435 = vadd.f32 %v433, %v434
    %v436 = vsel %vm64, %v410, 0.0
    %v437 = vrot.slane %v436, 4
    %v438 = vadd.f32 %v436, %v437
    %v439 = vrot.slane %v438, 2
    %v440 = vadd.f32 %v438, %v439
    %v441 = vrot.slane %v440, 1
    %v442 = vadd.f32 %v440, %v441
    %v443 = vsel %vm64, %v411, 0.0
    %v444 = vrot.slane %v443, 4
    %v445 = vadd.f32 %v443, %v444
    %v446 = vrot.slane %v445, 2
    %v447 = vadd.f32 %v445, %v446
    %v448 = vrot.slane %v447, 1
    %v449 = vadd.f32 %v447, %v448
    %v450 = vsel %vm64, %v412, 0.0
    %v451 = vrot.slane %v450, 4
    %v452 = vadd.f32 %v450, %v451
    %v453 = vrot.slane %v452, 2
    %v454 = vadd.f32 %v452, %v453
    %v455 = vrot.slane %v454, 1
    %v456 = vadd.f32 %v454, %v455
    %v457 = vsel %vm64, %v413, 0.0
    %v458 = vrot.slane %v457, 4
    %v459 = vadd.f32 %v457, %v458
    %v460 = vrot.slane %v459, 2
    %v461 = vadd.f32 %v459, %v460
    %v462 = vrot.slane %v461, 1
    %v463 = vadd.f32 %v461, %v462
    %v464 = vsel %vm64, %v414, 0.0
    %v465 = vrot.slane %v464, 4
    %v466 = vadd.f32 %v464, %v465
    %v467 = vrot.slane %v466, 2
    %v468 = vadd.f32 %v466, %v467
    %v469 = vrot.slane %v468, 1
    %v470 = vadd.f32 %v468, %v469
    %v471 = vpack.c.bf16 %v421, %v421
    %v472 = vpack.c.bf16 %v428, %v428
    %v473 = vpack.c.bf16 %v435, %v435
    %v474 = vpack.c.bf16 %v442, %v442
    %v475 = vpack.c.bf16 %v449, %v449
    %v476 = vpack.c.bf16 %v456, %v456
    %v477 = vpack.c.bf16 %v463, %v463
    %v478 = vpack.c.bf16 %v470, %v470
    %479 = vst [vmem:[%s7] sm:$0xff] 0
    %480 = vst [vmem:[%s7 + $0x8] sm:$0xf] 0
    %vm481 = vcmask 125952
    %482 = vst.msk [vmem:[%s7] sm:$0xf] %vm481, %v45
    %v491 = vunpack.c.l.b16 %v471
    %v492 = vunpack.c.l.b16 %v472
    %v493 = vunpack.c.l.b16 %v473
    %v494 = vunpack.c.l.b16 %v474
    %v495 = vunpack.c.l.b16 %v475
    %v496 = vunpack.c.l.b16 %v476
    %v497 = vunpack.c.l.b16 %v477
    %v498 = vunpack.c.l.b16 %v478
    %v499 = vsel %vm226, %v492, %v491
    %v500 = vsel %vm228, %v493, %v499
    %v501 = vsel %vm230, %v494, %v500
    %v502 = vsel %vm232, %v495, %v501
    %v503 = vsel %vm234, %v496, %v502
    %v504 = vsel %vm236, %v497, %v503
    %v505 = vsel %vm238, %v498, %v504
    %v506 = vpack.c.b16 %v505, %v505
    %vm508 = vcmask 257024
    %509 = vst.msk [vmem:[%s7 + $0x4] sm:$0xf] %vm508, %v506
    %510 = vst.msk [vmem:[%s7 + $0x8] sm:$0xf] %vm508, %v47
    %v511 = vld [vmem:[%s7] sm:$0xff]
    %v512 = vld [vmem:[%s7 + $0x8] sm:$0xf]
    %v513 = vld [vmem:[#allocation2] sm:$0xff]
    %v514 = vld [vmem:[#allocation2 + $0x8] sm:$0xff]
    %v515 = vld [vmem:[#allocation2 + $0x10] sm:$0xff]
    %v516 = vld [vmem:[#allocation2 + $0x18] sm:$0xff]
    %v517 = vld [vmem:[#allocation2 + $0x20] sm:$0xff]
    %v518 = vld [vmem:[#allocation2 + $0x28] sm:$0xff]
    %v519 = vld [vmem:[#allocation2 + $0x30] sm:$0xff]
    %v520 = vld [vmem:[#allocation2 + $0x38] sm:$0xff]
    %v521 = vld [vmem:[#allocation2 + $0x40] sm:$0xff]
    %v522 = vld [vmem:[#allocation2 + $0x48] sm:$0xff]
    %v523 = vld [vmem:[#allocation2 + $0x50] sm:$0xff]
    %v524 = vld [vmem:[#allocation2 + $0x58] sm:$0xff]
    %v525 = vld [vmem:[#allocation2 + $0x60] sm:$0xff]
    %v526 = vld [vmem:[#allocation2 + $0x68] sm:$0xff]
    %v527 = vld [vmem:[#allocation2 + $0x70] sm:$0xff]
    %v528 = vld [vmem:[#allocation2 + $0x78] sm:$0xff]
    %v529 = vld [vmem:[#allocation2 + $0x80] sm:$0xff]
    %v530 = vld [vmem:[#allocation2 + $0x88] sm:$0xff]
    %v531 = vld [vmem:[#allocation2 + $0x90] sm:$0xff]
    %v532 = vld [vmem:[#allocation2 + $0x98] sm:$0xff]
    %v533 = vld [vmem:[#allocation2 + $0xa0] sm:$0xff]
    %v534 = vld [vmem:[#allocation2 + $0xa8] sm:$0xff]
    %v535 = vld [vmem:[#allocation2 + $0xb0] sm:$0xff]
    %v536 = vld [vmem:[#allocation2 + $0xb8] sm:$0xff]
    %v537 = vld [vmem:[#allocation2 + $0xc0] sm:$0xff]
    %v538 = vld [vmem:[#allocation2 + $0xc8] sm:$0xff]
    %v539 = vld [vmem:[#allocation2 + $0xd0] sm:$0xff]
    %v540 = vld [vmem:[#allocation2 + $0xd8] sm:$0xff]
    %v541 = vld [vmem:[#allocation2 + $0xe0] sm:$0xff]
    %v542 = vld [vmem:[#allocation2 + $0xe8] sm:$0xff]
    %v543 = vld [vmem:[#allocation2 + $0xf0] sm:$0xff]
    %v544 = vld [vmem:[#allocation2 + $0xf8] sm:$0xff]
    %v545 = vld [vmem:[#allocation2 + $0x100] sm:$0xff]
    %v546 = vld [vmem:[#allocation2 + $0x108] sm:$0xff]
    %v547 = vld [vmem:[#allocation2 + $0x110] sm:$0xff]
    %v548 = vld [vmem:[#allocation2 + $0x118] sm:$0xff]
    %v549 = vld [vmem:[#allocation2 + $0x120] sm:$0xff]
    %v550 = vld [vmem:[#allocation2 + $0x128] sm:$0xff]
    %v551 = vld [vmem:[#allocation2 + $0x130] sm:$0xff]
    %v552 = vld [vmem:[#allocation2 + $0x138] sm:$0xff]
    %v553 = vld [vmem:[#allocation2 + $0x140] sm:$0xff]
    %v554 = vld [vmem:[#allocation2 + $0x148] sm:$0xff]
    %v555 = vld [vmem:[#allocation2 + $0x150] sm:$0xff]
    %v556 = vld [vmem:[#allocation2 + $0x158] sm:$0xff]
    %v557 = vld [vmem:[#allocation2 + $0x160] sm:$0xff]
    %v558 = vld [vmem:[#allocation2 + $0x168] sm:$0xff]
    %v559 = vld [vmem:[#allocation2 + $0x170] sm:$0xff]
    %v560 = vld [vmem:[#allocation2 + $0x178] sm:$0xff]
    %v561 = vld [vmem:[#allocation2 + $0x180] sm:$0xff]
    %v562 = vld [vmem:[#allocation2 + $0x188] sm:$0xff]
    %v563 = vld [vmem:[#allocation2 + $0x190] sm:$0xff]
    %v564 = vld [vmem:[#allocation2 + $0x198] sm:$0xff]
    %v565 = vld [vmem:[#allocation2 + $0x1a0] sm:$0xff]
    %v566 = vld [vmem:[#allocation2 + $0x1a8] sm:$0xff]
    %v567 = vld [vmem:[#allocation2 + $0x1b0] sm:$0xff]
    %v568 = vld [vmem:[#allocation2 + $0x1b8] sm:$0xff]
    %v569 = vld [vmem:[#allocation2 + $0x1c0] sm:$0xff]
    %v570 = vld [vmem:[#allocation2 + $0x1c8] sm:$0xff]
    %v571 = vld [vmem:[#allocation2 + $0x1d0] sm:$0xff]
    %v572 = vld [vmem:[#allocation2 + $0x1d8] sm:$0xff]
    %v573 = vld [vmem:[#allocation2 + $0x1e0] sm:$0xff]
    %v574 = vld [vmem:[#allocation2 + $0x1e8] sm:$0xff]
    %v575 = vld [vmem:[#allocation2 + $0x1f0] sm:$0xff]
    %v576 = vld [vmem:[#allocation2 + $0x1f8] sm:$0xff]
    %v577 = vld [vmem:[#allocation2 + $0x200] sm:$0xff]
    %v578 = vld [vmem:[#allocation2 + $0x208] sm:$0xff]
    %v579 = vld [vmem:[#allocation2 + $0x210] sm:$0xff]
    %v580 = vld [vmem:[#allocation2 + $0x218] sm:$0xff]
    %v581 = vld [vmem:[#allocation2 + $0x220] sm:$0xff]
    %v582 = vld [vmem:[#allocation2 + $0x228] sm:$0xff]
    %v583 = vld [vmem:[#allocation2 + $0x230] sm:$0xff]
    %v584 = vld [vmem:[#allocation2 + $0x238] sm:$0xff]
    %v585 = vld [vmem:[#allocation2 + $0x240] sm:$0xff]
    %v586 = vld [vmem:[#allocation2 + $0x248] sm:$0xff]
    %v587 = vld [vmem:[#allocation2 + $0x250] sm:$0xff]
    %v588 = vld [vmem:[#allocation2 + $0x258] sm:$0xff]
    %v589 = vld [vmem:[#allocation2 + $0x260] sm:$0xff]
    %v590 = vld [vmem:[#allocation2 + $0x268] sm:$0xff]
    %v591 = vld [vmem:[#allocation2 + $0x270] sm:$0xff]
    %v592 = vld [vmem:[#allocation2 + $0x278] sm:$0xff]
    %v593 = vld [vmem:[#allocation2 + $0x280] sm:$0xff]
    %v594 = vld [vmem:[#allocation2 + $0x288] sm:$0xff]
    %v595 = vld [vmem:[#allocation2 + $0x290] sm:$0xff]
    %v596 = vld [vmem:[#allocation2 + $0x298] sm:$0xff]
    %v597 = vld [vmem:[#allocation2 + $0x2a0] sm:$0xff]
    %v598 = vld [vmem:[#allocation2 + $0x2a8] sm:$0xff]
    %v599 = vld [vmem:[#allocation2 + $0x2b0] sm:$0xff]
    %v600 = vld [vmem:[#allocation2 + $0x2b8] sm:$0xff]
    %v601 = vld [vmem:[#allocation2 + $0x2c0] sm:$0xff]
    %v602 = vld [vmem:[#allocation2 + $0x2c8] sm:$0xff]
    %v603 = vld [vmem:[#allocation2 + $0x2d0] sm:$0xff]
    %v604 = vld [vmem:[#allocation2 + $0x2d8] sm:$0xff]
    %v605 = vld [vmem:[#allocation2 + $0x2e0] sm:$0xff]
    %v606 = vld [vmem:[#allocation2 + $0x2e8] sm:$0xff]
    %v607 = vld [vmem:[#allocation2 + $0x2f0] sm:$0xff]
    %v608 = vld [vmem:[#allocation2 + $0x2f8] sm:$0xff]
    %v609 = vld [vmem:[%s6] sm:$0xf]
    %v611 = vperm.slane %v609, 0
    %v612 = vperm.slane %v609, 1
    %v613 = vperm.slane %v609, 2
    %v614 = vperm.slane %v609, 3
    %v621 = vunpack.c.l.b16 %v511
    %v622 = vunpack.c.h.b16 %v511
    %v623 = vunpack.c.l.b16 %v512
    %v624 = vpack.c.b16 %v621, %v621
    %v625 = vpack.c.b16 %v622, %v622
    %v626 = vpack.c.b16 %v623, %v623
    %v726 = vunpack.c.l.b16 %v513
    %v727 = vunpack.c.h.b16 %v513
    %v728 = vunpack.c.l.b16 %v514
    %v729 = vunpack.c.h.b16 %v514
    %v730 = vunpack.c.l.b16 %v515
    %v731 = vunpack.c.h.b16 %v515
    %v732 = vunpack.c.l.b16 %v516
    %v733 = vunpack.c.h.b16 %v516
    %v734 = vunpack.c.l.b16 %v517
    %v735 = vunpack.c.h.b16 %v517
    %v736 = vunpack.c.l.b16 %v518
    %v737 = vunpack.c.h.b16 %v518
    %v738 = vunpack.c.l.b16 %v519
    %v739 = vunpack.c.h.b16 %v519
    %v740 = vunpack.c.l.b16 %v520
    %v741 = vunpack.c.h.b16 %v520
    %v742 = vunpack.c.l.b16 %v521
    %v743 = vunpack.c.h.b16 %v521
    %v744 = vunpack.c.l.b16 %v522
    %v745 = vunpack.c.h.b16 %v522
    %v746 = vunpack.c.l.b16 %v523
    %v747 = vunpack.c.h.b16 %v523
    %v748 = vunpack.c.l.b16 %v524
    %v749 = vunpack.c.h.b16 %v524
    %v750 = vunpack.c.l.b16 %v525
    %v751 = vunpack.c.h.b16 %v525
    %v752 = vunpack.c.l.b16 %v526
    %v753 = vunpack.c.h.b16 %v526
    %v754 = vunpack.c.l.b16 %v527
    %v755 = vunpack.c.h.b16 %v527
    %v756 = vunpack.c.l.b16 %v528
    %v757 = vunpack.c.h.b16 %v528
    %v758 = vunpack.c.l.b16 %v529
    %v759 = vunpack.c.h.b16 %v529
    %v760 = vunpack.c.l.b16 %v530
    %v761 = vunpack.c.h.b16 %v530
    %v762 = vunpack.c.l.b16 %v531
    %v763 = vunpack.c.h.b16 %v531
    %v764 = vunpack.c.l.b16 %v532
    %v765 = vunpack.c.h.b16 %v532
    %v766 = vunpack.c.l.b16 %v533
    %v767 = vunpack.c.h.b16 %v533
    %v768 = vunpack.c.l.b16 %v534
    %v769 = vunpack.c.h.b16 %v534
    %v770 = vunpack.c.l.b16 %v535
    %v771 = vunpack.c.h.b16 %v535
    %v772 = vunpack.c.l.b16 %v536
    %v773 = vunpack.c.h.b16 %v536
    %v774 = vunpack.c.l.b16 %v537
    %v775 = vunpack.c.h.b16 %v537
    %v776 = vunpack.c.l.b16 %v538
    %v777 = vunpack.c.h.b16 %v538
    %v778 = vunpack.c.l.b16 %v539
    %v779 = vunpack.c.h.b16 %v539
    %v780 = vunpack.c.l.b16 %v540
    %v781 = vunpack.c.h.b16 %v540
    %v782 = vunpack.c.l.b16 %v541
    %v783 = vunpack.c.h.b16 %v541
    %v784 = vunpack.c.l.b16 %v542
    %v785 = vunpack.c.h.b16 %v542
    %v786 = vunpack.c.l.b16 %v543
    %v787 = vunpack.c.h.b16 %v543
    %v788 = vunpack.c.l.b16 %v544
    %v789 = vunpack.c.h.b16 %v544
    %v790 = vunpack.c.l.b16 %v545
    %v791 = vunpack.c.h.b16 %v545
    %v792 = vunpack.c.l.b16 %v546
    %v793 = vunpack.c.h.b16 %v546
    %v794 = vunpack.c.l.b16 %v547
    %v795 = vunpack.c.h.b16 %v547
    %v796 = vunpack.c.l.b16 %v548
    %v797 = vunpack.c.h.b16 %v548
    %v798 = vunpack.c.l.b16 %v549
    %v799 = vunpack.c.h.b16 %v549
    %v800 = vunpack.c.l.b16 %v550
    %v801 = vunpack.c.h.b16 %v550
    %v802 = vunpack.c.l.b16 %v551
    %v803 = vunpack.c.h.b16 %v551
    %v804 = vunpack.c.l.b16 %v552
    %v805 = vunpack.c.h.b16 %v552
    %v806 = vunpack.c.l.b16 %v553
    %v807 = vunpack.c.h.b16 %v553
    %v808 = vunpack.c.l.b16 %v554
    %v809 = vunpack.c.h.b16 %v554
    %v810 = vunpack.c.l.b16 %v555
    %v811 = vunpack.c.h.b16 %v555
    %v812 = vunpack.c.l.b16 %v556
    %v813 = vunpack.c.h.b16 %v556
    %v814 = vunpack.c.l.b16 %v557
    %v815 = vunpack.c.h.b16 %v557
    %v816 = vunpack.c.l.b16 %v558
    %v817 = vunpack.c.h.b16 %v558
    %v818 = vunpack.c.l.b16 %v559
    %v819 = vunpack.c.h.b16 %v559
    %v820 = vunpack.c.l.b16 %v560
    %v821 = vunpack.c.h.b16 %v560
    %v822 = vunpack.c.l.b16 %v561
    %v823 = vunpack.c.h.b16 %v561
    %v824 = vunpack.c.l.b16 %v562
    %v825 = vunpack.c.h.b16 %v562
    %v826 = vunpack.c.l.b16 %v563
    %v827 = vunpack.c.h.b16 %v563
    %v828 = vunpack.c.l.b16 %v564
    %v829 = vunpack.c.h.b16 %v564
    %v830 = vunpack.c.l.b16 %v565
    %v831 = vunpack.c.h.b16 %v565
    %v832 = vunpack.c.l.b16 %v566
    %v833 = vunpack.c.h.b16 %v566
    %v834 = vunpack.c.l.b16 %v567
    %v835 = vunpack.c.h.b16 %v567
    %v836 = vunpack.c.l.b16 %v568
    %v837 = vunpack.c.h.b16 %v568
    %v838 = vunpack.c.l.b16 %v569
    %v839 = vunpack.c.h.b16 %v569
    %v840 = vunpack.c.l.b16 %v570
    %v841 = vunpack.c.h.b16 %v570
    %v842 = vunpack.c.l.b16 %v571
    %v843 = vunpack.c.h.b16 %v571
    %v844 = vunpack.c.l.b16 %v572
    %v845 = vunpack.c.h.b16 %v572
    %v846 = vunpack.c.l.b16 %v573
    %v847 = vunpack.c.h.b16 %v573
    %v848 = vunpack.c.l.b16 %v574
    %v849 = vunpack.c.h.b16 %v574
    %v850 = vunpack.c.l.b16 %v575
    %v851 = vunpack.c.h.b16 %v575
    %v852 = vunpack.c.l.b16 %v576
    %v853 = vunpack.c.h.b16 %v576
    %v854 = vunpack.c.l.b16 %v577
    %v855 = vunpack.c.h.b16 %v577
    %v856 = vunpack.c.l.b16 %v578
    %v857 = vunpack.c.h.b16 %v578
    %v858 = vunpack.c.l.b16 %v579
    %v859 = vunpack.c.h.b16 %v579
    %v860 = vunpack.c.l.b16 %v580
    %v861 = vunpack.c.h.b16 %v580
    %v862 = vunpack.c.l.b16 %v581
    %v863 = vunpack.c.h.b16 %v581
    %v864 = vunpack.c.l.b16 %v582
    %v865 = vunpack.c.h.b16 %v582
    %v866 = vunpack.c.l.b16 %v583
    %v867 = vunpack.c.h.b16 %v583
    %v868 = vunpack.c.l.b16 %v584
    %v869 = vunpack.c.h.b16 %v584
    %v870 = vunpack.c.l.b16 %v585
    %v871 = vunpack.c.h.b16 %v585
    %v872 = vunpack.c.l.b16 %v586
    %v873 = vunpack.c.h.b16 %v586
    %v874 = vunpack.c.l.b16 %v587
    %v875 = vunpack.c.h.b16 %v587
    %v876 = vunpack.c.l.b16 %v588
    %v877 = vunpack.c.h.b16 %v588
    %v878 = vunpack.c.l.b16 %v589
    %v879 = vunpack.c.h.b16 %v589
    %v880 = vunpack.c.l.b16 %v590
    %v881 = vunpack.c.h.b16 %v590
    %v882 = vunpack.c.l.b16 %v591
    %v883 = vunpack.c.h.b16 %v591
    %v884 = vunpack.c.l.b16 %v592
    %v885 = vunpack.c.h.b16 %v592
    %v886 = vunpack.c.l.b16 %v593
    %v887 = vunpack.c.h.b16 %v593
    %v888 = vunpack.c.l.b16 %v594
    %v889 = vunpack.c.h.b16 %v594
    %v890 = vunpack.c.l.b16 %v595
    %v891 = vunpack.c.h.b16 %v595
    %v892 = vunpack.c.l.b16 %v596
    %v893 = vunpack.c.h.b16 %v596
    %v894 = vunpack.c.l.b16 %v597
    %v895 = vunpack.c.h.b16 %v597
    %v896 = vunpack.c.l.b16 %v598
    %v897 = vunpack.c.h.b16 %v598
    %v898 = vunpack.c.l.b16 %v599
    %v899 = vunpack.c.h.b16 %v599
    %v900 = vunpack.c.l.b16 %v600
    %v901 = vunpack.c.h.b16 %v600
    %v902 = vunpack.c.l.b16 %v601
    %v903 = vunpack.c.h.b16 %v601
    %v904 = vunpack.c.l.b16 %v602
    %v905 = vunpack.c.h.b16 %v602
    %v906 = vunpack.c.l.b16 %v603
    %v907 = vunpack.c.h.b16 %v603
    %v908 = vunpack.c.l.b16 %v604
    %v909 = vunpack.c.h.b16 %v604
    %v910 = vunpack.c.l.b16 %v605
    %v911 = vunpack.c.h.b16 %v605
    %v912 = vunpack.c.l.b16 %v606
    %v913 = vunpack.c.h.b16 %v606
    %v914 = vunpack.c.l.b16 %v607
    %v915 = vunpack.c.h.b16 %v607
    %v916 = vunpack.c.l.b16 %v608
    %v917 = vunpack.c.h.b16 %v608
    %v918 = vpack.c.b16 %v730, %v726
    %v919 = vpack.c.b16 %v731, %v727
    %v920 = vpack.c.b16 %v732, %v728
    %v921 = vpack.c.b16 %v733, %v729
    %v922 = vpack.c.b16 %v738, %v734
    %v923 = vpack.c.b16 %v739, %v735
    %v924 = vpack.c.b16 %v740, %v736
    %v925 = vpack.c.b16 %v741, %v737
    %v926 = vpack.c.b16 %v746, %v742
    %v927 = vpack.c.b16 %v747, %v743
    %v928 = vpack.c.b16 %v748, %v744
    %v929 = vpack.c.b16 %v749, %v745
    %v930 = vpack.c.b16 %v754, %v750
    %v931 = vpack.c.b16 %v755, %v751
    %v932 = vpack.c.b16 %v756, %v752
    %v933 = vpack.c.b16 %v757, %v753
    %v934 = vpack.c.b16 %v762, %v758
    %v935 = vpack.c.b16 %v763, %v759
    %v936 = vpack.c.b16 %v764, %v760
    %v937 = vpack.c.b16 %v765, %v761
    %v938 = vpack.c.b16 %v770, %v766
    %v939 = vpack.c.b16 %v771, %v767
    %v940 = vpack.c.b16 %v772, %v768
    %v941 = vpack.c.b16 %v773, %v769
    %v942 = vpack.c.b16 %v778, %v774
    %v943 = vpack.c.b16 %v779, %v775
    %v944 = vpack.c.b16 %v780, %v776
    %v945 = vpack.c.b16 %v781, %v777
    %v946 = vpack.c.b16 %v786, %v782
    %v947 = vpack.c.b16 %v787, %v783
    %v948 = vpack.c.b16 %v788, %v784
    %v949 = vpack.c.b16 %v789, %v785
    %v950 = vpack.c.b16 %v794, %v790
    %v951 = vpack.c.b16 %v795, %v791
    %v952 = vpack.c.b16 %v796, %v792
    %v953 = vpack.c.b16 %v797, %v793
    %v954 = vpack.c.b16 %v802, %v798
    %v955 = vpack.c.b16 %v803, %v799
    %v956 = vpack.c.b16 %v804, %v800
    %v957 = vpack.c.b16 %v805, %v801
    %v958 = vpack.c.b16 %v810, %v806
    %v959 = vpack.c.b16 %v811, %v807
    %v960 = vpack.c.b16 %v812, %v808
    %v961 = vpack.c.b16 %v813, %v809
    %v962 = vpack.c.b16 %v818, %v814
    %v963 = vpack.c.b16 %v819, %v815
    %v964 = vpack.c.b16 %v820, %v816
    %v965 = vpack.c.b16 %v821, %v817
    %v966 = vpack.c.b16 %v826, %v822
    %v967 = vpack.c.b16 %v827, %v823
    %v968 = vpack.c.b16 %v828, %v824
    %v969 = vpack.c.b16 %v829, %v825
    %v970 = vpack.c.b16 %v834, %v830
    %v971 = vpack.c.b16 %v835, %v831
    %v972 = vpack.c.b16 %v836, %v832
    %v973 = vpack.c.b16 %v837, %v833
    %v974 = vpack.c.b16 %v842, %v838
    %v975 = vpack.c.b16 %v843, %v839
    %v976 = vpack.c.b16 %v844, %v840
    %v977 = vpack.c.b16 %v845, %v841
    %v978 = vpack.c.b16 %v850, %v846
    %v979 = vpack.c.b16 %v851, %v847
    %v980 = vpack.c.b16 %v852, %v848
    %v981 = vpack.c.b16 %v853, %v849
    %v982 = vpack.c.b16 %v858, %v854
    %v983 = vpack.c.b16 %v859, %v855
    %v984 = vpack.c.b16 %v860, %v856
    %v985 = vpack.c.b16 %v861, %v857
    %v986 = vpack.c.b16 %v866, %v862
    %v987 = vpack.c.b16 %v867, %v863
    %v988 = vpack.c.b16 %v868, %v864
    %v989 = vpack.c.b16 %v869, %v865
    %v990 = vpack.c.b16 %v874, %v870
    %v991 = vpack.c.b16 %v875, %v871
    %v992 = vpack.c.b16 %v876, %v872
    %v993 = vpack.c.b16 %v877, %v873
    %v994 = vpack.c.b16 %v882, %v878
    %v995 = vpack.c.b16 %v883, %v879
    %v996 = vpack.c.b16 %v884, %v880
    %v997 = vpack.c.b16 %v885, %v881
    %v998 = vpack.c.b16 %v890, %v886
    %v999 = vpack.c.b16 %v891, %v887
    %v1000 = vpack.c.b16 %v892, %v888
    %v1001 = vpack.c.b16 %v893, %v889
    %v1002 = vpack.c.b16 %v898, %v894
    %v1003 = vpack.c.b16 %v899, %v895
    %v1004 = vpack.c.b16 %v900, %v896
    %v1005 = vpack.c.b16 %v901, %v897
    %v1006 = vpack.c.b16 %v906, %v902
    %v1007 = vpack.c.b16 %v907, %v903
    %v1008 = vpack.c.b16 %v908, %v904
    %v1009 = vpack.c.b16 %v909, %v905
    %v1010 = vpack.c.b16 %v914, %v910
    %v1011 = vpack.c.b16 %v915, %v911
    %v1012 = vpack.c.b16 %v916, %v912
    %v1013 = vpack.c.b16 %v917, %v913
    %1110 = vmatpush.bf16.msra.mxu0 %v946
    %1111 = vmatpush.bf16.msra.mxu0 %v942
    %1112 = vmatpush.bf16.msra.mxu0 %v938
    %1113 = vmatpush.bf16.msra.mxu0 %v934
    %1114 = vmatpush.bf16.msra.mxu0 %v930
    %1115 = vmatpush.bf16.msra.mxu0 %v926
    %1116 = vmatpush.bf16.msra.mxu0 %v922
    %1117 = vmatpush.bf16.msra.mxu0 %v918
    %1118 = vmatmul.bf16.gmra.mxu0 %v624
    %v1119 = vpop.f32.mrf.mxu0
    %v1120 = vadd.f32 %v611, %v1119
    %v1121 = vpop.f32.mrf.mxu0
    %1122 = vdwg.mxu0
    %1123 = vmatpush.bf16.msra.mxu0 %v978
    %1124 = vmatpush.bf16.msra.mxu0 %v974
    %1125 = vmatpush.bf16.msra.mxu0 %v970
    %1126 = vmatpush.bf16.msra.mxu0 %v966
    %1127 = vmatpush.bf16.msra.mxu0 %v962
    %1128 = vmatpush.bf16.msra.mxu0 %v958
    %1129 = vmatpush.bf16.msra.mxu0 %v954
    %1130 = vmatpush.bf16.msra.mxu0 %v950
    %1131 = vmatmul.bf16.gmra.mxu0 %v625
    %v1132 = vpop.f32.mrf.mxu0
    %v1133 = vadd.f32 %v1120, %v1132
    %v1134 = vpop.f32.mrf.mxu0
    %1135 = vdwg.mxu0
    %1136 = vmatpush.bf16.msra.mxu0 %v1010
    %1137 = vmatpush.bf16.msra.mxu0 %v1006
    %1138 = vmatpush.bf16.msra.mxu0 %v1002
    %1139 = vmatpush.bf16.msra.mxu0 %v998
    %1140 = vmatpush.bf16.msra.mxu0 %v994
    %1141 = vmatpush.bf16.msra.mxu0 %v990
    %1142 = vmatpush.bf16.msra.mxu0 %v986
    %1143 = vmatpush.bf16.msra.mxu0 %v982
    %1144 = vmatmul.bf16.gmra.mxu0 %v626
    %v1145 = vpop.f32.mrf.mxu0
    %v1146 = vadd.f32 %v1133, %v1145
    %v1147 = vpop.f32.mrf.mxu0
    %1148 = vdwg.mxu0
    %1149 = vmatpush.bf16.msra.mxu0 %v947
    %1150 = vmatpush.bf16.msra.mxu0 %v943
    %1151 = vmatpush.bf16.msra.mxu0 %v939
    %1152 = vmatpush.bf16.msra.mxu0 %v935
    %1153 = vmatpush.bf16.msra.mxu0 %v931
    %1154 = vmatpush.bf16.msra.mxu0 %v927
    %1155 = vmatpush.bf16.msra.mxu0 %v923
    %1156 = vmatpush.bf16.msra.mxu0 %v919
    %1157 = vmatmul.bf16.gmra.mxu0 %v624
    %v1158 = vpop.f32.mrf.mxu0
    %v1159 = vadd.f32 %v612, %v1158
    %v1160 = vpop.f32.mrf.mxu0
    %1161 = vdwg.mxu0
    %1162 = vmatpush.bf16.msra.mxu0 %v979
    %1163 = vmatpush.bf16.msra.mxu0 %v975
    %1164 = vmatpush.bf16.msra.mxu0 %v971
    %1165 = vmatpush.bf16.msra.mxu0 %v967
    %1166 = vmatpush.bf16.msra.mxu0 %v963
    %1167 = vmatpush.bf16.msra.mxu0 %v959
    %1168 = vmatpush.bf16.msra.mxu0 %v955
    %1169 = vmatpush.bf16.msra.mxu0 %v951
    %1170 = vmatmul.bf16.gmra.mxu0 %v625
    %v1171 = vpop.f32.mrf.mxu0
    %v1172 = vadd.f32 %v1159, %v1171
    %v1173 = vpop.f32.mrf.mxu0
    %1174 = vdwg.mxu0
    %1175 = vmatpush.bf16.msra.mxu0 %v1011
    %1176 = vmatpush.bf16.msra.mxu0 %v1007
    %1177 = vmatpush.bf16.msra.mxu0 %v1003
    %1178 = vmatpush.bf16.msra.mxu0 %v999
    %1179 = vmatpush.bf16.msra.mxu0 %v995
    %1180 = vmatpush.bf16.msra.mxu0 %v991
    %1181 = vmatpush.bf16.msra.mxu0 %v987
    %1182 = vmatpush.bf16.msra.mxu0 %v983
    %1183 = vmatmul.bf16.gmra.mxu0 %v626
    %v1184 = vpop.f32.mrf.mxu0
    %v1185 = vadd.f32 %v1172, %v1184
    %v1186 = vpop.f32.mrf.mxu0
    %1187 = vdwg.mxu0
    %1188 = vmatpush.bf16.msra.mxu0 %v948
    %1189 = vmatpush.bf16.msra.mxu0 %v944
    %1190 = vmatpush.bf16.msra.mxu0 %v940
    %1191 = vmatpush.bf16.msra.mxu0 %v936
    %1192 = vmatpush.bf16.msra.mxu0 %v932
    %1193 = vmatpush.bf16.msra.mxu0 %v928
    %1194 = vmatpush.bf16.msra.mxu0 %v924
    %1195 = vmatpush.bf16.msra.mxu0 %v920
    %1196 = vmatmul.bf16.gmra.mxu0 %v624
    %v1197 = vpop.f32.mrf.mxu0
    %v1198 = vadd.f32 %v613, %v1197
    %v1199 = vpop.f32.mrf.mxu0
    %1200 = vdwg.mxu0
    %1201 = vmatpush.bf16.msra.mxu0 %v980
    %1202 = vmatpush.bf16.msra.mxu0 %v976
    %1203 = vmatpush.bf16.msra.mxu0 %v972
    %1204 = vmatpush.bf16.msra.mxu0 %v968
    %1205 = vmatpush.bf16.msra.mxu0 %v964
    %1206 = vmatpush.bf16.msra.mxu0 %v960
    %1207 = vmatpush.bf16.msra.mxu0 %v956
    %1208 = vmatpush.bf16.msra.mxu0 %v952
    %1209 = vmatmul.bf16.gmra.mxu0 %v625
    %v1210 = vpop.f32.mrf.mxu0
    %v1211 = vadd.f32 %v1198, %v1210
    %v1212 = vpop.f32.mrf.mxu0
    %1213 = vdwg.mxu0
    %1214 = vmatpush.bf16.msra.mxu0 %v1012
    %1215 = vmatpush.bf16.msra.mxu0 %v1008
    %1216 = vmatpush.bf16.msra.mxu0 %v1004
    %1217 = vmatpush.bf16.msra.mxu0 %v1000
    %1218 = vmatpush.bf16.msra.mxu0 %v996
    %1219 = vmatpush.bf16.msra.mxu0 %v992
    %1220 = vmatpush.bf16.msra.mxu0 %v988
    %1221 = vmatpush.bf16.msra.mxu0 %v984
    %1222 = vmatmul.bf16.gmra.mxu0 %v626
    %v1223 = vpop.f32.mrf.mxu0
    %v1224 = vadd.f32 %v1211, %v1223
    %v1225 = vpop.f32.mrf.mxu0
    %1226 = vdwg.mxu0
    %1227 = vmatpush.bf16.msra.mxu0 %v949
    %1228 = vmatpush.bf16.msra.mxu0 %v945
    %1229 = vmatpush.bf16.msra.mxu0 %v941
    %1230 = vmatpush.bf16.msra.mxu0 %v937
    %1231 = vmatpush.bf16.msra.mxu0 %v933
    %1232 = vmatpush.bf16.msra.mxu0 %v929
    %1233 = vmatpush.bf16.msra.mxu0 %v925
    %1234 = vmatpush.bf16.msra.mxu0 %v921
    %1235 = vmatmul.bf16.gmra.mxu0 %v624
    %v1236 = vpop.f32.mrf.mxu0
    %v1237 = vadd.f32 %v614, %v1236
    %v1238 = vpop.f32.mrf.mxu0
    %1239 = vdwg.mxu0
    %1240 = vmatpush.bf16.msra.mxu0 %v981
    %1241 = vmatpush.bf16.msra.mxu0 %v977
    %1242 = vmatpush.bf16.msra.mxu0 %v973
    %1243 = vmatpush.bf16.msra.mxu0 %v969
    %1244 = vmatpush.bf16.msra.mxu0 %v965
    %1245 = vmatpush.bf16.msra.mxu0 %v961
    %1246 = vmatpush.bf16.msra.mxu0 %v957
    %1247 = vmatpush.bf16.msra.mxu0 %v953
    %1248 = vmatmul.bf16.gmra.mxu0 %v625
    %v1249 = vpop.f32.mrf.mxu0
    %v1250 = vadd.f32 %v1237, %v1249
    %v1251 = vpop.f32.mrf.mxu0
    %1252 = vdwg.mxu0
    %1253 = vmatpush.bf16.msra.mxu0 %v1013
    %1254 = vmatpush.bf16.msra.mxu0 %v1009
    %1255 = vmatpush.bf16.msra.mxu0 %v1005
    %1256 = vmatpush.bf16.msra.mxu0 %v1001
    %1257 = vmatpush.bf16.msra.mxu0 %v997
    %1258 = vmatpush.bf16.msra.mxu0 %v993
    %1259 = vmatpush.bf16.msra.mxu0 %v989
    %1260 = vmatpush.bf16.msra.mxu0 %v985
    %1261 = vmatmul.bf16.gmra.mxu0 %v626
    %v1262 = vpop.f32.mrf.mxu0
    %v1263 = vadd.f32 %v1250, %v1262
    %v1264 = vpop.f32.mrf.mxu0
    %1265 = vdwg.mxu0
    %v1266 = vxor.u32 %v1146, 2147483648
    %v1267 = vmul.f32 %v1266, 1.442695
    %v1268 = vpow.pop %v1267
    %v1269 = vadd.f32 %v1268, 1.0
    %v1270 = vrcp.pop %v1269
    %v1271 = vmul.f32 %v1269, %v1270
    %v1272 = vsub.f32 1.0, %v1271
    %v1273 = vmul.f32 %v1270, %v1272
    %v1274 = vadd.f32 %v1270, %v1273
    %vm1275 = vweird.f32 %v1269
    %vm1276 = vweird.f32 %v1270
    %vm1277 = vmor %vm1275, %vm1276
    %v1278 = vsel %vm1277, %v1270, %v1274
    %v1279 = vand.u32 2147483647, %v1269
    %vm1280 = vcmp.eq.f32.partialorder %v1279, 8.507059e+37
    %v1281 = vand.u32 %v1269, 2147483648
    %v1282 = vor.u32 1.1754944e-38, %v1281
    %v1283 = vsel %vm1280, %v1282, %v1278
    %v1284 = vmul.f32 1.0, %v1283
    %v1285 = vxor.u32 %v1185, 2147483648
    %v1286 = vmul.f32 %v1285, 1.442695
    %v1287 = vpow.pop %v1286
    %v1288 = vadd.f32 %v1287, 1.0
    %v1289 = vrcp.pop %v1288
    %v1290 = vmul.f32 %v1288, %v1289
    %v1291 = vsub.f32 1.0, %v1290
    %v1292 = vmul.f32 %v1289, %v1291
    %v1293 = vadd.f32 %v1289, %v1292
    %vm1294 = vweird.f32 %v1288
    %vm1295 = vweird.f32 %v1289
    %vm1296 = vmor %vm1294, %vm1295
    %v1297 = vsel %vm1296, %v1289, %v1293
    %v1298 = vand.u32 2147483647, %v1288
    %vm1299 = vcmp.eq.f32.partialorder %v1298, 8.507059e+37
    %v1300 = vand.u32 %v1288, 2147483648
    %v1301 = vor.u32 1.1754944e-38, %v1300
    %v1302 = vsel %vm1299, %v1301, %v1297
    %v1303 = vmul.f32 1.0, %v1302
    %v1304 = vmul.f32 %v1284, %v1263
    %v1305 = vadd.f32 %v1224, %v1304
    %v1306 = vtanh.pop %v1305
    %v1307 = vsub.f32 1.0, %v1303
    %v1308 = vmul.f32 %v1307, %v1306
    %v1309 = vmul.f32 %v1303, %v46
    %v1310 = vadd.f32 %v1308, %v1309
    %1311 = vst.msk [vmem:[%s8] sm:$0xff] %vm64, %v1310
    %v1312 = vpack.c.bf16 %v1310, %v1310
    %1313 = vst.msk [vmem:[%s7 + $0x8] sm:$0xf] %vm508, %v1312
    // Predicated region
    $region34: #{decoder_forward.2} parent=1 // pred_check
      _
    $region35: #{decoder_forward.2} parent=1 // pred_check_branch
      %1315 = sbr.rel (0) target = $region37
    $region36: #{decoder_forward.2} parent=1 // pred_region
      _
    $region37: #{decoder_forward.2} parent=1 // pred_fallthru
      _
    // Predicated region
    $region38: #{decoder_forward.2} parent=1 // pred_check
      _
    $region39: #{decoder_forward.2} parent=1 // pred_check_branch
      %1317 = sbr.rel (0) target = $region41
    $region40: #{decoder_forward.2} parent=1 // pred_region
      _
    $region41: #{decoder_forward.2} parent=1 // pred_fallthru
      _
    // Predicated region
    $region42: #{decoder_forward.2} parent=1 // pred_check
      _
    $region43: #{decoder_forward.2} parent=1 // pred_check_branch
      %1319 = sbr.rel (0) target = $region45
    $region44: #{decoder_forward.2} parent=1 // pred_region
      _
    $region45: #{decoder_forward.2} parent=1 // pred_fallthru
      _
    // Predicated region
    $region46: #{decoder_forward.2} parent=1 // pred_check
      _
    $region47: #{decoder_forward.2} parent=1 // pred_check_branch
      %1321 = sbr.rel (0) target = $region49
    $region48: #{decoder_forward.2} parent=1 // pred_region
      _
    $region49: #{decoder_forward.2} parent=1 // pred_fallthru
      _
    %1322 = vsyncpa [#allocation3], 1

</llo_original>
